<compile_context>
chip_gen: v6e
topology: v6e:2x2x1
jax: 0.10.0
libtpu: 0.0.40
codegen_flags: <defaults>
</compile_context>

<pallas_src>
import jax
import jax.numpy as jnp
from jax.experimental import pallas as pl
from jax.experimental.pallas import tpu as pltpu

VOCAB = 27


def _round_up(x, m):
    return ((x + m - 1) // m) * m


def decoder_kernel(tok_ref, h_ref, w_ref, b_ref, emb_ref, wc_ref, bc_ref,
                   h_out_ref, logits_ref):
    B = tok_ref.shape[0]
    HP = h_ref.shape[2]          # hidden size padded to a 128-lane slab
    VP = emb_ref.shape[0]        # vocab padded to 128 lanes

    # --- embedding lookup as one-hot matmul (exact: 0/1 weights, f32 acc) ---
    tok = tok_ref[...]                                            # (B, 1) int32
    lane = jax.lax.broadcasted_iota(jnp.int32, (B, VP), 1)        # (B, VP)
    onehot = (lane == tok).astype(jnp.bfloat16)
    x = jnp.dot(onehot, emb_ref[...],
                preferred_element_type=jnp.float32)               # (B, HP) f32

    def gru_cell(layer, inp, h):
        # torch.nn.GRUCell semantics, gate order [r | z | n]; each gate sits
        # in its own lane-aligned HP-wide slab.
        gi = jnp.dot(inp.astype(jnp.bfloat16),
                     w_ref[layer, :, 0:3 * HP],
                     preferred_element_type=jnp.float32)
        gi = gi + b_ref[2 * layer:2 * layer + 1, :]               # (B, 3HP)
        gh = jnp.dot(h.astype(jnp.bfloat16),
                     w_ref[layer, :, 3 * HP:6 * HP],
                     preferred_element_type=jnp.float32)
        gh = gh + b_ref[2 * layer + 1:2 * layer + 2, :]           # (B, 3HP)

        r = jax.nn.sigmoid(gi[:, 0:HP] + gh[:, 0:HP])
        z = jax.nn.sigmoid(gi[:, HP:2 * HP] + gh[:, HP:2 * HP])
        n = jnp.tanh(gi[:, 2 * HP:3 * HP] + r * gh[:, 2 * HP:3 * HP])
        return (1.0 - z) * n + z * h

    inp = x
    for layer in range(3):                 # static unroll over the 3 GRU cells
        h_new = gru_cell(layer, inp, h_ref[layer])
        h_out_ref[layer] = h_new
        inp = h_new

    logits_ref[...] = (jnp.dot(inp.astype(jnp.bfloat16), wc_ref[...],
                               preferred_element_type=jnp.float32)
                       + bc_ref[...])


# ----------------------------------------------------------------------------
# Parameter construction / packing
# ----------------------------------------------------------------------------
def init_params(key, n_hidden):
    """Deterministic synthetic parameters in logical x @ W layout (f32)."""
    H = n_hidden
    ks = jax.random.split(key, 16)
    s = 1.0 / jnp.sqrt(jnp.float32(H))

    def u(k, shape):
        return jax.random.uniform(k, shape, jnp.float32, -s, s)

    params = {"embed": jax.random.normal(ks[0], (VOCAB, H), jnp.float32)}
    i = 1
    for g in (1, 2, 3):
        params[f"wih{g}"] = u(ks[i], (H, 3 * H)); i += 1      # x @ W_ih
        params[f"whh{g}"] = u(ks[i], (H, 3 * H)); i += 1      # h @ W_hh
        params[f"bih{g}"] = u(ks[i], (1, 3 * H)); i += 1
        params[f"bhh{g}"] = u(ks[i], (1, 3 * H)); i += 1
    params["wc"] = u(ks[13], (H, VOCAB))
    params["bc"] = u(ks[14], (1, VOCAB))
    return params


def pack_params(params, H):
    """Pad/pack logical params into the lane-aligned kernel layout."""
    HP = _round_up(H, 128)
    VP = _round_up(VOCAB, 128)

    def pad_to(a, shape):
        out = jnp.zeros(shape, a.dtype)
        return out.at[tuple(slice(0, s) for s in a.shape)].set(a)

    def expand_gate_cols(w):
        # (H, 3H) -> (HP, 3*HP): each gate gets its own 128-lane slab.
        out = jnp.zeros((HP, 3 * HP), jnp.float32)
        for g in range(3):
            out = out.at[:H, g * HP:g * HP + H].set(w[:, g * H:(g + 1) * H])
        return out

    def expand_gate_bias(b):
        out = jnp.zeros((1, 3 * HP), jnp.float32)
        for g in range(3):
            out = out.at[:, g * HP:g * HP + H].set(b[:, g * H:(g + 1) * H])
        return out

    w_layers, b_rows = [], []
    for g in (1, 2, 3):
        wih = expand_gate_cols(params[f"wih{g}"])
        whh = expand_gate_cols(params[f"whh{g}"])
        w_layers.append(jnp.concatenate([wih, whh], axis=1))      # (HP, 6*HP)
        b_rows.append(expand_gate_bias(params[f"bih{g}"]))
        b_rows.append(expand_gate_bias(params[f"bhh{g}"]))

    return {
        "w":   jnp.stack(w_layers).astype(jnp.bfloat16),          # (3, HP, 6HP)
        "b":   jnp.concatenate(b_rows, axis=0),                   # (6, 3HP) f32
        "emb": pad_to(params["embed"], (VP, HP)).astype(jnp.bfloat16),
        "wc":  pad_to(params["wc"], (HP, VP)).astype(jnp.bfloat16),
        "bc":  pad_to(params["bc"], (1, VP)),                     # (1, VP) f32
    }


# ----------------------------------------------------------------------------
# Wrapper
# ----------------------------------------------------------------------------
def decoder_forward(tokens, f1, f2, f3, packed):
    B, H = f1.shape
    HP = packed["w"].shape[1]
    VP = packed["emb"].shape[0]

    tok2d = tokens.reshape(B, 1).astype(jnp.int32)
    h_stack = jnp.zeros((3, B, HP), jnp.float32)
    h_stack = (h_stack.at[0, :, :H].set(f1)
                      .at[1, :, :H].set(f2)
                      .at[2, :, :H].set(f3))

    vmem = pl.BlockSpec(memory_space=pltpu.MemorySpace.VMEM)
    h_out, logits = pl.pallas_call(
        decoder_kernel,
        out_shape=(jax.ShapeDtypeStruct((3, B, HP), jnp.float32),
                   jax.ShapeDtypeStruct((B, VP), jnp.float32)),
        in_specs=[vmem] * 7,
        out_specs=(vmem, vmem),
    )(tok2d, h_stack, packed["w"], packed["b"],
      packed["emb"], packed["wc"], packed["bc"])

    return (h_out[0, :, :H], h_out[1, :, :H], h_out[2, :, :H],
            logits[:, :VOCAB])


# ----------------------------------------------------------------------------
# Pure-JAX reference (torch GRUCell semantics; weights rounded to bf16 and
# matmul inputs cast to bf16 with f32 accumulation, matching the kernel's
# numerics — so the comparison checks packing/layout/gate order, not dtype).
# ----------------------------------------------------------------------------
def decoder_reference(tokens, f1, f2, f3, params):
    H = f1.shape[1]
    bf = jnp.bfloat16

    def dot_bf16(a, w):
        return jnp.dot(a.astype(bf), w.astype(bf),
                       preferred_element_type=jnp.float32)

    x = params["embed"].astype(bf)[tokens].astype(jnp.float32)

    def gru(x, h, wih, whh, bih, bhh):
        gi = dot_bf16(x, wih) + bih
        gh = dot_bf16(h, whh) + bhh
        r = jax.nn.sigmoid(gi[:, :H] + gh[:, :H])
        z = jax.nn.sigmoid(gi[:, H:2 * H] + gh[:, H:2 * H])
        n = jnp.tanh(gi[:, 2 * H:] + r * gh[:, 2 * H:])
        return (1.0 - z) * n + z * h

    h1 = gru(x, f1, params["wih1"], params["whh1"], params["bih1"], params["bhh1"])
    h2 = gru(h1, f2, params["wih2"], params["whh2"], params["bih2"], params["bhh2"])
    h3 = gru(h2, f3, params["wih3"], params["whh3"], params["bih3"], params["bhh3"])
    out = dot_bf16(h3, params["wc"]) + params["bc"]
    return h1, h2, h3, out


if __name__ == "__main__":
    B, H = 8, 32
    key = jax.random.PRNGKey(0)
    k_tok, k_f1, k_f2, k_f3, k_par = jax.random.split(key, 5)

    tokens = jax.random.randint(k_tok, (B,), 0, VOCAB, dtype=jnp.int32)
    f1 = jax.random.normal(k_f1, (B, H), jnp.float32)
    f2 = jax.random.normal(k_f2, (B, H), jnp.float32)
    f3 = jax.random.normal(k_f3, (B, H), jnp.float32)
    params = init_params(k_par, H)
    packed = pack_params(params, H)

    fwd = jax.jit(decoder_forward)
    h1, h2, h3, logits = jax.block_until_ready(
        fwd(tokens, f1, f2, f3, packed))

    r1, r2, r3, rlog = decoder_reference(tokens, f1, f2, f3, params)
    # Tolerance accounts for bf16 weight/activation rounding in both paths.
    for name, a, b in [("h1", h1, r1), ("h2", h2, r2),
                       ("h3", h3, r3), ("logits", logits, rlog)]:
        assert a.shape == b.shape, f"{name} shape mismatch"
        assert jnp.allclose(a, b, atol=1e-2, rtol=1e-2), (
            f"{name} mismatch, max abs diff "
            f"{float(jnp.max(jnp.abs(a - b)))}")

    print("KERNEL_OK")
</pallas_src>

<mosaic_0001>
module attributes {stable_mosaic.version = 11 : i64} {
  func.func @decoder_kernel(%arg0: memref<8x1xi32, #tpu.memory_space<vmem>>, %arg1: memref<3x8x128xf32, #tpu.memory_space<vmem>>, %arg2: memref<3x128x768xbf16, #tpu.memory_space<vmem>>, %arg3: memref<6x384xf32, #tpu.memory_space<vmem>>, %arg4: memref<128x128xbf16, #tpu.memory_space<vmem>>, %arg5: memref<128x128xbf16, #tpu.memory_space<vmem>>, %arg6: memref<1x128xf32, #tpu.memory_space<vmem>>, %arg7: memref<3x8x128xf32, #tpu.memory_space<vmem>>, %arg8: memref<8x128xf32, #tpu.memory_space<vmem>>) attributes {dimension_semantics = [], scalar_prefetch = 0 : i64, scratch_operands = 0 : i64, tpu.core_type = #tpu.core_type<tc>} {
    %c0 = arith.constant 0 : index
    %c0_0 = arith.constant 0 : index
    %0 = vector.load %arg0[%c0, %c0_0] : memref<8x1xi32, #tpu.memory_space<vmem>>, vector<8x1xi32>
    %1 = tpu.iota {dimensions = array<i32: 1>} : vector<8x128xi32>
    %2 = vector.broadcast %0 : vector<8x1xi32> to vector<8x128xi32>
    %3 = arith.cmpi eq, %1, %2 : vector<8x128xi32>
    %4 = arith.extui %3 : vector<8x128xi1> to vector<8x128xi32>
    %5 = arith.sitofp %4 : vector<8x128xi32> to vector<8x128xf32>
    %6 = arith.truncf %5 : vector<8x128xf32> to vector<8x128xbf16>
    %c0_1 = arith.constant 0 : index
    %c0_2 = arith.constant 0 : index
    %7 = vector.load %arg4[%c0_1, %c0_2] : memref<128x128xbf16, #tpu.memory_space<vmem>>, vector<128x128xbf16>
    %cst = arith.constant dense<0.000000e+00> : vector<8x128xf32>
    %8 = tpu.matmul %6, %7, %cst {dimension_numbers = #tpu.dot_dimension_numbers<[1], [0], [0], [1], [0, 0, 1, 1], [], []>} : vector<8x128xbf16>, vector<128x128xbf16>, vector<8x128xf32> -> vector<8x128xf32>
    %c0_3 = arith.constant 0 : index
    %c0_4 = arith.constant 0 : index
    %c0_5 = arith.constant 0 : index
    %9 = vector.load %arg1[%c0_3, %c0_4, %c0_5] : memref<3x8x128xf32, #tpu.memory_space<vmem>>, vector<1x8x128xf32>
    %10 = vector.shape_cast %9 : vector<1x8x128xf32> to vector<8x128xf32>
    %11 = arith.truncf %8 : vector<8x128xf32> to vector<8x128xbf16>
    %c0_6 = arith.constant 0 : index
    %c0_7 = arith.constant 0 : index
    %c0_8 = arith.constant 0 : index
    %12 = vector.load %arg2[%c0_6, %c0_7, %c0_8] : memref<3x128x768xbf16, #tpu.memory_space<vmem>>, vector<1x128x384xbf16>
    %13 = vector.shape_cast %12 : vector<1x128x384xbf16> to vector<128x384xbf16>
    %cst_9 = arith.constant dense<0.000000e+00> : vector<8x384xf32>
    %14 = tpu.matmul %11, %13, %cst_9 {dimension_numbers = #tpu.dot_dimension_numbers<[1], [0], [0], [1], [0, 0, 1, 1], [], []>} : vector<8x128xbf16>, vector<128x384xbf16>, vector<8x384xf32> -> vector<8x384xf32>
    %c0_10 = arith.constant 0 : index
    %c0_11 = arith.constant 0 : index
    %15 = vector.load %arg3[%c0_10, %c0_11] : memref<6x384xf32, #tpu.memory_space<vmem>>, vector<1x384xf32>
    %16 = vector.broadcast %15 : vector<1x384xf32> to vector<8x384xf32>
    %17 = arith.addf %14, %16 : vector<8x384xf32>
    %18 = arith.truncf %10 : vector<8x128xf32> to vector<8x128xbf16>
    %c0_12 = arith.constant 0 : index
    %c0_13 = arith.constant 0 : index
    %c384 = arith.constant 384 : index
    %19 = vector.load %arg2[%c0_12, %c0_13, %c384] : memref<3x128x768xbf16, #tpu.memory_space<vmem>>, vector<1x128x384xbf16>
    %20 = vector.shape_cast %19 : vector<1x128x384xbf16> to vector<128x384xbf16>
    %cst_14 = arith.constant dense<0.000000e+00> : vector<8x384xf32>
    %21 = tpu.matmul %18, %20, %cst_14 {dimension_numbers = #tpu.dot_dimension_numbers<[1], [0], [0], [1], [0, 0, 1, 1], [], []>} : vector<8x128xbf16>, vector<128x384xbf16>, vector<8x384xf32> -> vector<8x384xf32>
    %c1 = arith.constant 1 : index
    %c0_15 = arith.constant 0 : index
    %22 = vector.load %arg3[%c1, %c0_15] : memref<6x384xf32, #tpu.memory_space<vmem>>, vector<1x384xf32>
    %23 = vector.broadcast %22 : vector<1x384xf32> to vector<8x384xf32>
    %24 = arith.addf %21, %23 : vector<8x384xf32>
    %25 = vector.extract_strided_slice %17 {offsets = [0, 0], sizes = [8, 128], strides = [1, 1]} : vector<8x384xf32> to vector<8x128xf32>
    %26 = vector.extract_strided_slice %24 {offsets = [0, 0], sizes = [8, 128], strides = [1, 1]} : vector<8x384xf32> to vector<8x128xf32>
    %27 = arith.addf %25, %26 : vector<8x128xf32>
    %28 = arith.negf %27 : vector<8x128xf32>
    %29 = math.exp %28 : vector<8x128xf32>
    %cst_16 = arith.constant 1.000000e+00 : f32
    %30 = vector.broadcast %cst_16 : f32 to vector<8x128xf32>
    %31 = arith.addf %30, %29 : vector<8x128xf32>
    %32 = arith.divf %30, %31 : vector<8x128xf32>
    %33 = vector.extract_strided_slice %17 {offsets = [0, 128], sizes = [8, 128], strides = [1, 1]} : vector<8x384xf32> to vector<8x128xf32>
    %34 = vector.extract_strided_slice %24 {offsets = [0, 128], sizes = [8, 128], strides = [1, 1]} : vector<8x384xf32> to vector<8x128xf32>
    %35 = arith.addf %33, %34 : vector<8x128xf32>
    %36 = arith.negf %35 : vector<8x128xf32>
    %37 = math.exp %36 : vector<8x128xf32>
    %cst_17 = arith.constant 1.000000e+00 : f32
    %38 = vector.broadcast %cst_17 : f32 to vector<8x128xf32>
    %39 = arith.addf %38, %37 : vector<8x128xf32>
    %40 = arith.divf %38, %39 : vector<8x128xf32>
    %41 = vector.extract_strided_slice %17 {offsets = [0, 256], sizes = [8, 128], strides = [1, 1]} : vector<8x384xf32> to vector<8x128xf32>
    %42 = vector.extract_strided_slice %24 {offsets = [0, 256], sizes = [8, 128], strides = [1, 1]} : vector<8x384xf32> to vector<8x128xf32>
    %43 = arith.mulf %32, %42 : vector<8x128xf32>
    %44 = arith.addf %41, %43 : vector<8x128xf32>
    %45 = math.tanh %44 : vector<8x128xf32>
    %cst_18 = arith.constant 1.000000e+00 : f32
    %46 = vector.broadcast %cst_18 : f32 to vector<8x128xf32>
    %47 = arith.subf %46, %40 : vector<8x128xf32>
    %48 = arith.mulf %47, %45 : vector<8x128xf32>
    %49 = arith.mulf %40, %10 : vector<8x128xf32>
    %50 = arith.addf %48, %49 : vector<8x128xf32>
    %c0_19 = arith.constant 0 : index
    %c0_20 = arith.constant 0 : index
    %c0_21 = arith.constant 0 : index
    %51 = vector.load %arg7[%c0_19, %c0_20, %c0_21] : memref<3x8x128xf32, #tpu.memory_space<vmem>>, vector<1x8x128xf32>
    %52 = vector.shape_cast %51 : vector<1x8x128xf32> to vector<8x128xf32>
    %53 = vector.shape_cast %50 : vector<8x128xf32> to vector<1x8x128xf32>
    tpu.vector_store %arg7[%c0_19, %c0_20, %c0_21], %53 {strides = array<i32>} : memref<3x8x128xf32, #tpu.memory_space<vmem>>, vector<1x8x128xf32>,
    %c1_22 = arith.constant 1 : index
    %c0_23 = arith.constant 0 : index
    %c0_24 = arith.constant 0 : index
    %54 = vector.load %arg1[%c1_22, %c0_23, %c0_24] : memref<3x8x128xf32, #tpu.memory_space<vmem>>, vector<1x8x128xf32>
    %55 = vector.shape_cast %54 : vector<1x8x128xf32> to vector<8x128xf32>
    %56 = arith.truncf %50 : vector<8x128xf32> to vector<8x128xbf16>
    %c1_25 = arith.constant 1 : index
    %c0_26 = arith.constant 0 : index
    %c0_27 = arith.constant 0 : index
    %57 = vector.load %arg2[%c1_25, %c0_26, %c0_27] : memref<3x128x768xbf16, #tpu.memory_space<vmem>>, vector<1x128x384xbf16>
    %58 = vector.shape_cast %57 : vector<1x128x384xbf16> to vector<128x384xbf16>
    %cst_28 = arith.constant dense<0.000000e+00> : vector<8x384xf32>
    %59 = tpu.matmul %56, %58, %cst_28 {dimension_numbers = #tpu.dot_dimension_numbers<[1], [0], [0], [1], [0, 0, 1, 1], [], []>} : vector<8x128xbf16>, vector<128x384xbf16>, vector<8x384xf32> -> vector<8x384xf32>
    %c2 = arith.constant 2 : index
    %c0_29 = arith.constant 0 : index
    %60 = vector.load %arg3[%c2, %c0_29] : memref<6x384xf32, #tpu.memory_space<vmem>>, vector<1x384xf32>
    %61 = vector.broadcast %60 : vector<1x384xf32> to vector<8x384xf32>
    %62 = arith.addf %59, %61 : vector<8x384xf32>
    %63 = arith.truncf %55 : vector<8x128xf32> to vector<8x128xbf16>
    %c1_30 = arith.constant 1 : index
    %c0_31 = arith.constant 0 : index
    %c384_32 = arith.constant 384 : index
    %64 = vector.load %arg2[%c1_30, %c0_31, %c384_32] : memref<3x128x768xbf16, #tpu.memory_space<vmem>>, vector<1x128x384xbf16>
    %65 = vector.shape_cast %64 : vector<1x128x384xbf16> to vector<128x384xbf16>
    %cst_33 = arith.constant dense<0.000000e+00> : vector<8x384xf32>
    %66 = tpu.matmul %63, %65, %cst_33 {dimension_numbers = #tpu.dot_dimension_numbers<[1], [0], [0], [1], [0, 0, 1, 1], [], []>} : vector<8x128xbf16>, vector<128x384xbf16>, vector<8x384xf32> -> vector<8x384xf32>
    %c3 = arith.constant 3 : index
    %c0_34 = arith.constant 0 : index
    %67 = vector.load %arg3[%c3, %c0_34] : memref<6x384xf32, #tpu.memory_space<vmem>>, vector<1x384xf32>
    %68 = vector.broadcast %67 : vector<1x384xf32> to vector<8x384xf32>
    %69 = arith.addf %66, %68 : vector<8x384xf32>
    %70 = vector.extract_strided_slice %62 {offsets = [0, 0], sizes = [8, 128], strides = [1, 1]} : vector<8x384xf32> to vector<8x128xf32>
    %71 = vector.extract_strided_slice %69 {offsets = [0, 0], sizes = [8, 128], strides = [1, 1]} : vector<8x384xf32> to vector<8x128xf32>
    %72 = arith.addf %70, %71 : vector<8x128xf32>
    %73 = arith.negf %72 : vector<8x128xf32>
    %74 = math.exp %73 : vector<8x128xf32>
    %cst_35 = arith.constant 1.000000e+00 : f32
    %75 = vector.broadcast %cst_35 : f32 to vector<8x128xf32>
    %76 = arith.addf %75, %74 : vector<8x128xf32>
    %77 = arith.divf %75, %76 : vector<8x128xf32>
    %78 = vector.extract_strided_slice %62 {offsets = [0, 128], sizes = [8, 128], strides = [1, 1]} : vector<8x384xf32> to vector<8x128xf32>
    %79 = vector.extract_strided_slice %69 {offsets = [0, 128], sizes = [8, 128], strides = [1, 1]} : vector<8x384xf32> to vector<8x128xf32>
    %80 = arith.addf %78, %79 : vector<8x128xf32>
    %81 = arith.negf %80 : vector<8x128xf32>
    %82 = math.exp %81 : vector<8x128xf32>
    %cst_36 = arith.constant 1.000000e+00 : f32
    %83 = vector.broadcast %cst_36 : f32 to vector<8x128xf32>
    %84 = arith.addf %83, %82 : vector<8x128xf32>
    %85 = arith.divf %83, %84 : vector<8x128xf32>
    %86 = vector.extract_strided_slice %62 {offsets = [0, 256], sizes = [8, 128], strides = [1, 1]} : vector<8x384xf32> to vector<8x128xf32>
    %87 = vector.extract_strided_slice %69 {offsets = [0, 256], sizes = [8, 128], strides = [1, 1]} : vector<8x384xf32> to vector<8x128xf32>
    %88 = arith.mulf %77, %87 : vector<8x128xf32>
    %89 = arith.addf %86, %88 : vector<8x128xf32>
    %90 = math.tanh %89 : vector<8x128xf32>
    %cst_37 = arith.constant 1.000000e+00 : f32
    %91 = vector.broadcast %cst_37 : f32 to vector<8x128xf32>
    %92 = arith.subf %91, %85 : vector<8x128xf32>
    %93 = arith.mulf %92, %90 : vector<8x128xf32>
    %94 = arith.mulf %85, %55 : vector<8x128xf32>
    %95 = arith.addf %93, %94 : vector<8x128xf32>
    %c1_38 = arith.constant 1 : index
    %c0_39 = arith.constant 0 : index
    %c0_40 = arith.constant 0 : index
    %96 = vector.load %arg7[%c1_38, %c0_39, %c0_40] : memref<3x8x128xf32, #tpu.memory_space<vmem>>, vector<1x8x128xf32>
    %97 = vector.shape_cast %96 : vector<1x8x128xf32> to vector<8x128xf32>
    %98 = vector.shape_cast %95 : vector<8x128xf32> to vector<1x8x128xf32>
    tpu.vector_store %arg7[%c1_38, %c0_39, %c0_40], %98 {strides = array<i32>} : memref<3x8x128xf32, #tpu.memory_space<vmem>>, vector<1x8x128xf32>,
    %c2_41 = arith.constant 2 : index
    %c0_42 = arith.constant 0 : index
    %c0_43 = arith.constant 0 : index
    %99 = vector.load %arg1[%c2_41, %c0_42, %c0_43] : memref<3x8x128xf32, #tpu.memory_space<vmem>>, vector<1x8x128xf32>
    %100 = vector.shape_cast %99 : vector<1x8x128xf32> to vector<8x128xf32>
    %101 = arith.truncf %95 : vector<8x128xf32> to vector<8x128xbf16>
    %c2_44 = arith.constant 2 : index
    %c0_45 = arith.constant 0 : index
    %c0_46 = arith.constant 0 : index
    %102 = vector.load %arg2[%c2_44, %c0_45, %c0_46] : memref<3x128x768xbf16, #tpu.memory_space<vmem>>, vector<1x128x384xbf16>
    %103 = vector.shape_cast %102 : vector<1x128x384xbf16> to vector<128x384xbf16>
    %cst_47 = arith.constant dense<0.000000e+00> : vector<8x384xf32>
    %104 = tpu.matmul %101, %103, %cst_47 {dimension_numbers = #tpu.dot_dimension_numbers<[1], [0], [0], [1], [0, 0, 1, 1], [], []>} : vector<8x128xbf16>, vector<128x384xbf16>, vector<8x384xf32> -> vector<8x384xf32>
    %c4 = arith.constant 4 : index
    %c0_48 = arith.constant 0 : index
    %105 = vector.load %arg3[%c4, %c0_48] : memref<6x384xf32, #tpu.memory_space<vmem>>, vector<1x384xf32>
    %106 = vector.broadcast %105 : vector<1x384xf32> to vector<8x384xf32>
    %107 = arith.addf %104, %106 : vector<8x384xf32>
    %108 = arith.truncf %100 : vector<8x128xf32> to vector<8x128xbf16>
    %c2_49 = arith.constant 2 : index
    %c0_50 = arith.constant 0 : index
    %c384_51 = arith.constant 384 : index
    %109 = vector.load %arg2[%c2_49, %c0_50, %c384_51] : memref<3x128x768xbf16, #tpu.memory_space<vmem>>, vector<1x128x384xbf16>
    %110 = vector.shape_cast %109 : vector<1x128x384xbf16> to vector<128x384xbf16>
    %cst_52 = arith.constant dense<0.000000e+00> : vector<8x384xf32>
    %111 = tpu.matmul %108, %110, %cst_52 {dimension_numbers = #tpu.dot_dimension_numbers<[1], [0], [0], [1], [0, 0, 1, 1], [], []>} : vector<8x128xbf16>, vector<128x384xbf16>, vector<8x384xf32> -> vector<8x384xf32>
    %c5 = arith.constant 5 : index
    %c0_53 = arith.constant 0 : index
    %112 = vector.load %arg3[%c5, %c0_53] : memref<6x384xf32, #tpu.memory_space<vmem>>, vector<1x384xf32>
    %113 = vector.broadcast %112 : vector<1x384xf32> to vector<8x384xf32>
    %114 = arith.addf %111, %113 : vector<8x384xf32>
    %115 = vector.extract_strided_slice %107 {offsets = [0, 0], sizes = [8, 128], strides = [1, 1]} : vector<8x384xf32> to vector<8x128xf32>
    %116 = vector.extract_strided_slice %114 {offsets = [0, 0], sizes = [8, 128], strides = [1, 1]} : vector<8x384xf32> to vector<8x128xf32>
    %117 = arith.addf %115, %116 : vector<8x128xf32>
    %118 = arith.negf %117 : vector<8x128xf32>
    %119 = math.exp %118 : vector<8x128xf32>
    %cst_54 = arith.constant 1.000000e+00 : f32
    %120 = vector.broadcast %cst_54 : f32 to vector<8x128xf32>
    %121 = arith.addf %120, %119 : vector<8x128xf32>
    %122 = arith.divf %120, %121 : vector<8x128xf32>
    %123 = vector.extract_strided_slice %107 {offsets = [0, 128], sizes = [8, 128], strides = [1, 1]} : vector<8x384xf32> to vector<8x128xf32>
    %124 = vector.extract_strided_slice %114 {offsets = [0, 128], sizes = [8, 128], strides = [1, 1]} : vector<8x384xf32> to vector<8x128xf32>
    %125 = arith.addf %123, %124 : vector<8x128xf32>
    %126 = arith.negf %125 : vector<8x128xf32>
    %127 = math.exp %126 : vector<8x128xf32>
    %cst_55 = arith.constant 1.000000e+00 : f32
    %128 = vector.broadcast %cst_55 : f32 to vector<8x128xf32>
    %129 = arith.addf %128, %127 : vector<8x128xf32>
    %130 = arith.divf %128, %129 : vector<8x128xf32>
    %131 = vector.extract_strided_slice %107 {offsets = [0, 256], sizes = [8, 128], strides = [1, 1]} : vector<8x384xf32> to vector<8x128xf32>
    %132 = vector.extract_strided_slice %114 {offsets = [0, 256], sizes = [8, 128], strides = [1, 1]} : vector<8x384xf32> to vector<8x128xf32>
    %133 = arith.mulf %122, %132 : vector<8x128xf32>
    %134 = arith.addf %131, %133 : vector<8x128xf32>
    %135 = math.tanh %134 : vector<8x128xf32>
    %cst_56 = arith.constant 1.000000e+00 : f32
    %136 = vector.broadcast %cst_56 : f32 to vector<8x128xf32>
    %137 = arith.subf %136, %130 : vector<8x128xf32>
    %138 = arith.mulf %137, %135 : vector<8x128xf32>
    %139 = arith.mulf %130, %100 : vector<8x128xf32>
    %140 = arith.addf %138, %139 : vector<8x128xf32>
    %c2_57 = arith.constant 2 : index
    %c0_58 = arith.constant 0 : index
    %c0_59 = arith.constant 0 : index
    %141 = vector.load %arg7[%c2_57, %c0_58, %c0_59] : memref<3x8x128xf32, #tpu.memory_space<vmem>>, vector<1x8x128xf32>
    %142 = vector.shape_cast %141 : vector<1x8x128xf32> to vector<8x128xf32>
    %143 = vector.shape_cast %140 : vector<8x128xf32> to vector<1x8x128xf32>
    tpu.vector_store %arg7[%c2_57, %c0_58, %c0_59], %143 {strides = array<i32>} : memref<3x8x128xf32, #tpu.memory_space<vmem>>, vector<1x8x128xf32>,
    %144 = arith.truncf %140 : vector<8x128xf32> to vector<8x128xbf16>
    %c0_60 = arith.constant 0 : index
    %c0_61 = arith.constant 0 : index
    %145 = vector.load %arg5[%c0_60, %c0_61] : memref<128x128xbf16, #tpu.memory_space<vmem>>, vector<128x128xbf16>
    %cst_62 = arith.constant dense<0.000000e+00> : vector<8x128xf32>
    %146 = tpu.matmul %144, %145, %cst_62 {dimension_numbers = #tpu.dot_dimension_numbers<[1], [0], [0], [1], [0, 0, 1, 1], [], []>} : vector<8x128xbf16>, vector<128x128xbf16>, vector<8x128xf32> -> vector<8x128xf32>
    %c0_63 = arith.constant 0 : index
    %c0_64 = arith.constant 0 : index
    %147 = vector.load %arg6[%c0_63, %c0_64] : memref<1x128xf32, #tpu.memory_space<vmem>>, vector<1x128xf32>
    %148 = vector.broadcast %147 : vector<1x128xf32> to vector<8x128xf32>
    %149 = arith.addf %146, %148 : vector<8x128xf32>
    %c0_65 = arith.constant 0 : index
    %c0_66 = arith.constant 0 : index
    %150 = vector.load %arg8[%c0_65, %c0_66] : memref<8x128xf32, #tpu.memory_space<vmem>>, vector<8x128xf32>
    tpu.vector_store %arg8[%c0_65, %c0_66], %149 {strides = array<i32>} : memref<8x128xf32, #tpu.memory_space<vmem>>, vector<8x128xf32>,
    return
  }
}

</mosaic_0001>

<llo_original>
// kernel: decoder_forward.1
$region0: #{decoder_forward.1}
  #allocation0 [shape = 'u32[]', space=smem, size = 0x4, offset = 0x4, fixed_abs, tag = 'smem constant byte address 0x4 - core index']
  #allocation1 [shape = 'u32[144,128]{1,0:T(1,128)}', space=vmem, size = 0x12000, scoped, tag = 'internal scratch']
  %s0 = inlined_call_operand.vmem [shape: s32[8,1], index: 0, kind: input, shape index: {}]
  %s1 = inlined_call_operand.vmem [shape: f32[3,8,128], index: 1, kind: input, shape index: {}]
  %s2 = inlined_call_operand.hbm [shape: bf16[3,128,768], index: 2, kind: input, shape index: {}]
  %s3 = inlined_call_operand.vmem [shape: f32[6,384], index: 3, kind: input, shape index: {}]
  %s4 = inlined_call_operand.vmem [shape: bf16[128,128], index: 4, kind: input, shape index: {}]
  %s5 = inlined_call_operand.hbm [shape: bf16[128,128], index: 5, kind: input, shape index: {}]
  %s6 = inlined_call_operand.vmem [shape: f32[1,128], index: 6, kind: input, shape index: {}]
  %s7 = inlined_call_operand.vmem [shape: f32[3,8,128], index: 7, kind: output, shape index: {0}]
  %s8 = inlined_call_operand.hbm [shape: f32[8,128], index: 8, kind: output, shape index: {1}]
  %9 = xla_tuple %s7, %s8
  %s10 = sld [smem:[#allocation0]]
  $region54: #{decoder_forward.1} parent=0
    _
  %s12 = ssub.s32 1, %s10
  %s13 = scalar_select 0, %s12, %s10
  $region1: #{decoder_forward.1} parent=0
    #allocation2 [shape = 'u8[589824]{0}', space=vmem, size = 0x90000, scoped, tag = 'input window, operand 2, single buffered']
    #allocation3 [shape = 's32[1]{0}', space=sflag, size = 0x4, scoped, tag = 'scoped memory for decoder_forward.1']
    #allocation4 [shape = 's32[1]{0}', space=sflag, size = 0x4, scoped, tag = 'scoped memory for decoder_forward.1']
    #allocation5 [shape = 'u8[32768]{0}', space=vmem, size = 0x8000, scoped, tag = 'input window, operand 5, single buffered']
    #allocation6 [shape = 's32[1]{0}', space=sflag, size = 0x4, scoped, tag = 'scoped memory for decoder_forward.1']
    #allocation7 [shape = 'u8[4096]{0}', space=vmem, size = 0x1000, scoped, tag = 'output window, operand 1, single buffered']
    %14 = vsyncpa [#allocation3], 0
    %15 = vsyncpa [#allocation6], 0
    %16 = vsyncpa [#allocation4], 0
    // Predicated region
    $region2: #{decoder_forward.1} parent=1 // pred_check
      _
    $region3: #{decoder_forward.1} parent=1 // pred_check_branch
      %18 = sbr.rel (0) target = $region5
    $region4: #{decoder_forward.1} parent=1 // pred_region
      _
    $region5: #{decoder_forward.1} parent=1 // pred_fallthru
      _
    // Predicated region
    $region6: #{decoder_forward.1} parent=1 // pred_check
      _
    $region7: #{decoder_forward.1} parent=1 // pred_check_branch
      %20 = sbr.rel (0) target = $region9
    $region8: #{decoder_forward.1} parent=1 // pred_region
      _
    $region9: #{decoder_forward.1} parent=1 // pred_fallthru
      _
    // Predicated region
    $region10: #{decoder_forward.1} parent=1 // pred_check
      _
    $region11: #{decoder_forward.1} parent=1 // pred_check_branch
      %22 = sbr.rel (0) target = $region13
    $region12: #{decoder_forward.1} parent=1 // pred_region
      %s24 = ssub.s32 18432, 18432
      %25 = vsyncadd [#allocation3], %s24
      %s26 = sshll.u32 [#allocation2], 4
      %s27 = int_to_ptr.vmem [resolvable:$true] %s26
      %32 = dma.hbm_to_vmem [thread:$0]  %s2, 18432, %s27, [#allocation3], 384, 384, 24
    $region13: #{decoder_forward.1} parent=1 // pred_fallthru
      _
    // Predicated region
    $region14: #{decoder_forward.1} parent=1 // pred_check
      _
    $region15: #{decoder_forward.1} parent=1 // pred_check_branch
      %34 = sbr.rel (0) target = $region17
    $region16: #{decoder_forward.1} parent=1 // pred_region
      _
    $region17: #{decoder_forward.1} parent=1 // pred_fallthru
      _
    // Predicated region
    $region18: #{decoder_forward.1} parent=1 // pred_check
      _
    $region19: #{decoder_forward.1} parent=1 // pred_check_branch
      %36 = sbr.rel (0) target = $region21
    $region20: #{decoder_forward.1} parent=1 // pred_region
      _
    $region21: #{decoder_forward.1} parent=1 // pred_fallthru
      _
    // Predicated region
    $region22: #{decoder_forward.1} parent=1 // pred_check
      _
    $region23: #{decoder_forward.1} parent=1 // pred_check_branch
      %38 = sbr.rel (0) target = $region25
    $region24: #{decoder_forward.1} parent=1 // pred_region
      %s40 = ssub.s32 1024, 1024
      %41 = vsyncadd [#allocation6], %s40
      %s42 = sshll.u32 [#allocation5], 4
      %s43 = int_to_ptr.vmem [resolvable:$true] %s42
      %48 = dma.hbm_to_vmem [thread:$0]  %s5, 1024, %s43, [#allocation6], 64, 64, 4
    $region25: #{decoder_forward.1} parent=1 // pred_fallthru
      _
    // Predicated region
    $region26: #{decoder_forward.1} parent=1 // pred_check
      _
    $region27: #{decoder_forward.1} parent=1 // pred_check_branch
      %50 = sbr.rel (0) target = $region29
    $region28: #{decoder_forward.1} parent=1 // pred_region
      _
    $region29: #{decoder_forward.1} parent=1 // pred_fallthru
      _
    // Predicated region
    $region30: #{decoder_forward.1} parent=1 // pred_check
      _
    $region31: #{decoder_forward.1} parent=1 // pred_check_branch
      %52 = sbr.rel (0) target = $region33
    $region32: #{decoder_forward.1} parent=1 // pred_region
      %53 = dma.done [#allocation3], 18432
    $region33: #{decoder_forward.1} parent=1 // pred_fallthru
      _
    // Predicated region
    $region34: #{decoder_forward.1} parent=1 // pred_check
      _
    $region35: #{decoder_forward.1} parent=1 // pred_check_branch
      %55 = sbr.rel (0) target = $region37
    $region36: #{decoder_forward.1} parent=1 // pred_region
      %56 = dma.done [#allocation6], 1024
    $region37: #{decoder_forward.1} parent=1 // pred_fallthru
      _
    %v58 = vld [vmem:[%s0] sm:$0xff]
    %v59 = vlaneseq
    %v60 = vand.u32 %v59, 127
    %61 = vset.pattern.permute.xlu0 0
    %62 = vperm.xlu0 %61, %v58
    %v63 = vpop.permute.xlu0 %62
    %vm64 = vcmp.eq.s32.totalorder %v60, %v63
    %v65 = vsel %vm64, 1, 0
    %v66 = vcvt.s32.f32 %v65
    %v67 = vpack.c.bf16 %v66, %v66
    %v68 = vld [vmem:[%s4] sm:$0xf]
    %v69 = vld [vmem:[%s4 + $0x4] sm:$0xf]
    %v70 = vld [vmem:[%s4 + $0x8] sm:$0xf]
    %v71 = vld [vmem:[%s4 + $0xc] sm:$0xf]
    %v72 = vld [vmem:[%s4 + $0x10] sm:$0xf]
    %v73 = vld [vmem:[%s4 + $0x14] sm:$0xf]
    %v74 = vld [vmem:[%s4 + $0x18] sm:$0xf]
    %v75 = vld [vmem:[%s4 + $0x1c] sm:$0xf]
    %v76 = vld [vmem:[%s4 + $0x20] sm:$0xf]
    %v77 = vld [vmem:[%s4 + $0x24] sm:$0xf]
    %v78 = vld [vmem:[%s4 + $0x28] sm:$0xf]
    %v79 = vld [vmem:[%s4 + $0x2c] sm:$0xf]
    %v80 = vld [vmem:[%s4 + $0x30] sm:$0xf]
    %v81 = vld [vmem:[%s4 + $0x34] sm:$0xf]
    %v82 = vld [vmem:[%s4 + $0x38] sm:$0xf]
    %v83 = vld [vmem:[%s4 + $0x3c] sm:$0xf]
    %v100 = vunpack.c.l.b16 %v68
    %v101 = vunpack.c.l.b16 %v69
    %v102 = vunpack.c.l.b16 %v70
    %v103 = vunpack.c.l.b16 %v71
    %v104 = vunpack.c.l.b16 %v72
    %v105 = vunpack.c.l.b16 %v73
    %v106 = vunpack.c.l.b16 %v74
    %v107 = vunpack.c.l.b16 %v75
    %v108 = vunpack.c.l.b16 %v76
    %v109 = vunpack.c.l.b16 %v77
    %v110 = vunpack.c.l.b16 %v78
    %v111 = vunpack.c.l.b16 %v79
    %v112 = vunpack.c.l.b16 %v80
    %v113 = vunpack.c.l.b16 %v81
    %v114 = vunpack.c.l.b16 %v82
    %v115 = vunpack.c.l.b16 %v83
    %v116 = vpack.c.b16 %v101, %v100
    %v117 = vpack.c.b16 %v103, %v102
    %v118 = vpack.c.b16 %v105, %v104
    %v119 = vpack.c.b16 %v107, %v106
    %v120 = vpack.c.b16 %v109, %v108
    %v121 = vpack.c.b16 %v111, %v110
    %v122 = vpack.c.b16 %v113, %v112
    %v123 = vpack.c.b16 %v115, %v114
    %132 = vmatprep.subr.bf16.mxu0 0
    %133 = vmatpush1.bf16.msra.mxu0 %v123
    %134 = vmatprep.subr.bf16.mxu0 0
    %135 = vmatpush1.bf16.msra.mxu0 %v122
    %136 = vmatprep.subr.bf16.mxu0 0
    %137 = vmatpush1.bf16.msra.mxu0 %v121
    %138 = vmatprep.subr.bf16.mxu0 0
    %139 = vmatpush1.bf16.msra.mxu0 %v120
    %140 = vmatprep.subr.bf16.mxu0 0
    %141 = vmatpush1.bf16.msra.mxu0 %v119
    %142 = vmatprep.subr.bf16.mxu0 0
    %143 = vmatpush1.bf16.msra.mxu0 %v118
    %144 = vmatprep.subr.bf16.mxu0 0
    %145 = vmatpush1.bf16.msra.mxu0 %v117
    %146 = vmatprep.subr.bf16.mxu0 0
    %147 = vmatpush1.bf16.msra.mxu0 %v116
    %148 = vmatprep.subr.bf16.mxu0 0
    %149 = vmatpush2.bf16.msra.mxu0 0
    %150 = vmatprep.subr.bf16.mxu0 0
    %151 = vmatpush2.bf16.msra.mxu0 0
    %152 = vmatprep.subr.bf16.mxu0 0
    %153 = vmatpush2.bf16.msra.mxu0 0
    %154 = vmatprep.subr.bf16.mxu0 0
    %155 = vmatpush2.bf16.msra.mxu0 0
    %156 = vmatprep.subr.bf16.mxu0 0
    %157 = vmatpush2.bf16.msra.mxu0 0
    %158 = vmatprep.subr.bf16.mxu0 0
    %159 = vmatpush2.bf16.msra.mxu0 0
    %160 = vmatprep.subr.bf16.mxu0 0
    %161 = vmatpush2.bf16.msra.mxu0 0
    %162 = vmatprep.subr.bf16.mxu0 0
    %163 = vmatpush2.bf16.msra.mxu0 0
    %164 = vmatprep.mubr.bf16.mxu0 0
    %165 = vmatmul.mubr.bf16.gmra.mxu0 %v67
    %v166 = vpop.f32.mrf.mxu0
    %v167 = vadd.f32 0.0, %v166
    %v168 = vpop.f32.mrf.mxu0
    %v169 = vpop.f32.mrf.mxu0
    %v170 = vpop.f32.mrf.mxu0
    %171 = vdwg.mxu0
    %v172 = vld [vmem:[%s1] sm:$0xff]
    %v173 = vpack.c.bf16 %v167, %v167
    %v174 = vld [vmem:[#allocation2] sm:$0xff]
    %v175 = vld [vmem:[#allocation2 + $0x8] sm:$0xf]
    %v176 = vld [vmem:[#allocation2 + $0x18] sm:$0xff]
    %v177 = vld [vmem:[#allocation2 + $0x20] sm:$0xf]
    %v178 = vld [vmem:[#allocation2 + $0x30] sm:$0xff]
    %v179 = vld [vmem:[#allocation2 + $0x38] sm:$0xf]
    %v180 = vld [vmem:[#allocation2 + $0x48] sm:$0xff]
    %v181 = vld [vmem:[#allocation2 + $0x50] sm:$0xf]
    %v182 = vld [vmem:[#allocation2 + $0x60] sm:$0xff]
    %v183 = vld [vmem:[#allocation2 + $0x68] sm:$0xf]
    %v184 = vld [vmem:[#allocation2 + $0x78] sm:$0xff]
    %v185 = vld [vmem:[#allocation2 + $0x80] sm:$0xf]
    %v186 = vld [vmem:[#allocation2 + $0x90] sm:$0xff]
    %v187 = vld [vmem:[#allocation2 + $0x98] sm:$0xf]
    %v188 = vld [vmem:[#allocation2 + $0xa8] sm:$0xff]
    %v189 = vld [vmem:[#allocation2 + $0xb0] sm:$0xf]
    %v190 = vld [vmem:[#allocation2 + $0xc0] sm:$0xff]
    %v191 = vld [vmem:[#allocation2 + $0xc8] sm:$0xf]
    %v192 = vld [vmem:[#allocation2 + $0xd8] sm:$0xff]
    %v193 = vld [vmem:[#allocation2 + $0xe0] sm:$0xf]
    %v194 = vld [vmem:[#allocation2 + $0xf0] sm:$0xff]
    %v195 = vld [vmem:[#allocation2 + $0xf8] sm:$0xf]
    %v196 = vld [vmem:[#allocation2 + $0x108] sm:$0xff]
    %v197 = vld [vmem:[#allocation2 + $0x110] sm:$0xf]
    %v198 = vld [vmem:[#allocation2 + $0x120] sm:$0xff]
    %v199 = vld [vmem:[#allocation2 + $0x128] sm:$0xf]
    %v200 = vld [vmem:[#allocation2 + $0x138] sm:$0xff]
    %v201 = vld [vmem:[#allocation2 + $0x140] sm:$0xf]
    %v202 = vld [vmem:[#allocation2 + $0x150] sm:$0xff]
    %v203 = vld [vmem:[#allocation2 + $0x158] sm:$0xf]
    %v204 = vld [vmem:[#allocation2 + $0x168] sm:$0xff]
    %v205 = vld [vmem:[#allocation2 + $0x170] sm:$0xf]
    %v206 = vld [vmem:[%s3] ss:$8 sm:$0x7]
    %v208 = vlaneseq
    %v209 = vshrl.u32 %v208, 7
    %v210 = vsub.s32 0, %v209
    %v211 = vrot.slane %v206, %v210
    %v212 = vlaneseq
    %v213 = vshrl.u32 %v212, 7
    %v214 = vsub.s32 1, %v213
    %v215 = vrot.slane %v206, %v214
    %v216 = vlaneseq
    %v217 = vshrl.u32 %v216, 7
    %v218 = vsub.s32 2, %v217
    %v219 = vrot.slane %v206, %v218
    %v255 = vunpack.c.l.b16 %v174
    %v256 = vunpack.c.h.b16 %v174
    %v257 = vunpack.c.l.b16 %v175
    %v258 = vunpack.c.l.b16 %v176
    %v259 = vunpack.c.h.b16 %v176
    %v260 = vunpack.c.l.b16 %v177
    %v261 = vunpack.c.l.b16 %v178
    %v262 = vunpack.c.h.b16 %v178
    %v263 = vunpack.c.l.b16 %v179
    %v264 = vunpack.c.l.b16 %v180
    %v265 = vunpack.c.h.b16 %v180
    %v266 = vunpack.c.l.b16 %v181
    %v267 = vunpack.c.l.b16 %v182
    %v268 = vunpack.c.h.b16 %v182
    %v269 = vunpack.c.l.b16 %v183
    %v270 = vunpack.c.l.b16 %v184
    %v271 = vunpack.c.h.b16 %v184
    %v272 = vunpack.c.l.b16 %v185
    %v273 = vunpack.c.l.b16 %v186
    %v274 = vunpack.c.h.b16 %v186
    %v275 = vunpack.c.l.b16 %v187
    %v276 = vunpack.c.l.b16 %v188
    %v277 = vunpack.c.h.b16 %v188
    %v278 = vunpack.c.l.b16 %v189
    %v279 = vunpack.c.l.b16 %v190
    %v280 = vunpack.c.h.b16 %v190
    %v281 = vunpack.c.l.b16 %v191
    %v282 = vunpack.c.l.b16 %v192
    %v283 = vunpack.c.h.b16 %v192
    %v284 = vunpack.c.l.b16 %v193
    %v285 = vunpack.c.l.b16 %v194
    %v286 = vunpack.c.h.b16 %v194
    %v287 = vunpack.c.l.b16 %v195
    %v288 = vunpack.c.l.b16 %v196
    %v289 = vunpack.c.h.b16 %v196
    %v290 = vunpack.c.l.b16 %v197
    %v291 = vunpack.c.l.b16 %v198
    %v292 = vunpack.c.h.b16 %v198
    %v293 = vunpack.c.l.b16 %v199
    %v294 = vunpack.c.l.b16 %v200
    %v295 = vunpack.c.h.b16 %v200
    %v296 = vunpack.c.l.b16 %v201
    %v297 = vunpack.c.l.b16 %v202
    %v298 = vunpack.c.h.b16 %v202
    %v299 = vunpack.c.l.b16 %v203
    %v300 = vunpack.c.l.b16 %v204
    %v301 = vunpack.c.h.b16 %v204
    %v302 = vunpack.c.l.b16 %v205
    %v303 = vpack.c.b16 %v258, %v255
    %v304 = vpack.c.b16 %v259, %v256
    %v305 = vpack.c.b16 %v260, %v257
    %v306 = vpack.c.b16 %v264, %v261
    %v307 = vpack.c.b16 %v265, %v262
    %v308 = vpack.c.b16 %v266, %v263
    %v309 = vpack.c.b16 %v270, %v267
    %v310 = vpack.c.b16 %v271, %v268
    %v311 = vpack.c.b16 %v272, %v269
    %v312 = vpack.c.b16 %v276, %v273
    %v313 = vpack.c.b16 %v277, %v274
    %v314 = vpack.c.b16 %v278, %v275
    %v315 = vpack.c.b16 %v282, %v279
    %v316 = vpack.c.b16 %v283, %v280
    %v317 = vpack.c.b16 %v284, %v281
    %v318 = vpack.c.b16 %v288, %v285
    %v319 = vpack.c.b16 %v289, %v286
    %v320 = vpack.c.b16 %v290, %v287
    %v321 = vpack.c.b16 %v294, %v291
    %v322 = vpack.c.b16 %v295, %v292
    %v323 = vpack.c.b16 %v296, %v293
    %v324 = vpack.c.b16 %v300, %v297
    %v325 = vpack.c.b16 %v301, %v298
    %v326 = vpack.c.b16 %v302, %v299
    %351 = vmatprep.subr.bf16.mxu0 %v325
    %352 = vmatpush1.bf16.msra.mxu0 %v324
    %353 = vmatprep.subr.bf16.mxu0 %v322
    %354 = vmatpush1.bf16.msra.mxu0 %v321
    %355 = vmatprep.subr.bf16.mxu0 %v319
    %356 = vmatpush1.bf16.msra.mxu0 %v318
    %357 = vmatprep.subr.bf16.mxu0 %v316
    %358 = vmatpush1.bf16.msra.mxu0 %v315
    %359 = vmatprep.subr.bf16.mxu0 %v313
    %360 = vmatpush1.bf16.msra.mxu0 %v312
    %361 = vmatprep.subr.bf16.mxu0 %v310
    %362 = vmatpush1.bf16.msra.mxu0 %v309
    %363 = vmatprep.subr.bf16.mxu0 %v307
    %364 = vmatpush1.bf16.msra.mxu0 %v306
    %365 = vmatprep.subr.bf16.mxu0 %v304
    %366 = vmatpush1.bf16.msra.mxu0 %v303
    %367 = vmatprep.subr.bf16.mxu0 0
    %368 = vmatpush2.bf16.msra.mxu0 0
    %369 = vmatprep.subr.bf16.mxu0 0
    %370 = vmatpush2.bf16.msra.mxu0 0
    %371 = vmatprep.subr.bf16.mxu0 0
    %372 = vmatpush2.bf16.msra.mxu0 0
    %373 = vmatprep.subr.bf16.mxu0 0
    %374 = vmatpush2.bf16.msra.mxu0 0
    %375 = vmatprep.subr.bf16.mxu0 0
    %376 = vmatpush2.bf16.msra.mxu0 0
    %377 = vmatprep.subr.bf16.mxu0 0
    %378 = vmatpush2.bf16.msra.mxu0 0
    %379 = vmatprep.subr.bf16.mxu0 0
    %380 = vmatpush2.bf16.msra.mxu0 0
    %381 = vmatprep.subr.bf16.mxu0 0
    %382 = vmatpush2.bf16.msra.mxu0 0
    %383 = vmatprep.mubr.bf16.mxu0 0
    %384 = vmatmul.mubr.bf16.gmra.mxu0 %v173
    %v385 = vpop.f32.mrf.mxu0
    %v386 = vadd.f32 %v211, %v385
    %v387 = vpop.f32.mrf.mxu0
    %v388 = vadd.f32 %v215, %v387
    %v389 = vpop.f32.mrf.mxu0
    %v390 = vpop.f32.mrf.mxu0
    %391 = vdwg.mxu0
    %392 = vmatprep.subr.bf16.mxu0 0
    %393 = vmatpush1.bf16.msra.mxu0 %v326
    %394 = vmatprep.subr.bf16.mxu0 0
    %395 = vmatpush1.bf16.msra.mxu0 %v323
    %396 = vmatprep.subr.bf16.mxu0 0
    %397 = vmatpush1.bf16.msra.mxu0 %v320
    %398 = vmatprep.subr.bf16.mxu0 0
    %399 = vmatpush1.bf16.msra.mxu0 %v317
    %400 = vmatprep.subr.bf16.mxu0 0
    %401 = vmatpush1.bf16.msra.mxu0 %v314
    %402 = vmatprep.subr.bf16.mxu0 0
    %403 = vmatpush1.bf16.msra.mxu0 %v311
    %404 = vmatprep.subr.bf16.mxu0 0
    %405 = vmatpush1.bf16.msra.mxu0 %v308
    %406 = vmatprep.subr.bf16.mxu0 0
    %407 = vmatpush1.bf16.msra.mxu0 %v305
    %408 = vmatprep.subr.bf16.mxu0 0
    %409 = vmatpush2.bf16.msra.mxu0 0
    %410 = vmatprep.subr.bf16.mxu0 0
    %411 = vmatpush2.bf16.msra.mxu0 0
    %412 = vmatprep.subr.bf16.mxu0 0
    %413 = vmatpush2.bf16.msra.mxu0 0
    %414 = vmatprep.subr.bf16.mxu0 0
    %415 = vmatpush2.bf16.msra.mxu0 0
    %416 = vmatprep.subr.bf16.mxu0 0
    %417 = vmatpush2.bf16.msra.mxu0 0
    %418 = vmatprep.subr.bf16.mxu0 0
    %419 = vmatpush2.bf16.msra.mxu0 0
    %420 = vmatprep.subr.bf16.mxu0 0
    %421 = vmatpush2.bf16.msra.mxu0 0
    %422 = vmatprep.subr.bf16.mxu0 0
    %423 = vmatpush2.bf16.msra.mxu0 0
    %424 = vmatprep.mubr.bf16.mxu0 0
    %425 = vmatmul.mubr.bf16.gmra.mxu0 %v173
    %v426 = vpop.f32.mrf.mxu0
    %v427 = vadd.f32 %v219, %v426
    %v428 = vpop.f32.mrf.mxu0
    %v429 = vpop.f32.mrf.mxu0
    %v430 = vpop.f32.mrf.mxu0
    %431 = vdwg.mxu0
    %v432 = vpack.c.bf16 %v172, %v172
    %v433 = vld [vmem:[#allocation2 + $0xc] sm:$0xff]
    %v434 = vld [vmem:[#allocation2 + $0x14] sm:$0xf]
    %v435 = vld [vmem:[#allocation2 + $0x24] sm:$0xff]
    %v436 = vld [vmem:[#allocation2 + $0x2c] sm:$0xf]
    %v437 = vld [vmem:[#allocation2 + $0x3c] sm:$0xff]
    %v438 = vld [vmem:[#allocation2 + $0x44] sm:$0xf]
    %v439 = vld [vmem:[#allocation2 + $0x54] sm:$0xff]
    %v440 = vld [vmem:[#allocation2 + $0x5c] sm:$0xf]
    %v441 = vld [vmem:[#allocation2 + $0x6c] sm:$0xff]
    %v442 = vld [vmem:[#allocation2 + $0x74] sm:$0xf]
    %v443 = vld [vmem:[#allocation2 + $0x84] sm:$0xff]
    %v444 = vld [vmem:[#allocation2 + $0x8c] sm:$0xf]
    %v445 = vld [vmem:[#allocation2 + $0x9c] sm:$0xff]
    %v446 = vld [vmem:[#allocation2 + $0xa4] sm:$0xf]
    %v447 = vld [vmem:[#allocation2 + $0xb4] sm:$0xff]
    %v448 = vld [vmem:[#allocation2 + $0xbc] sm:$0xf]
    %v449 = vld [vmem:[#allocation2 + $0xcc] sm:$0xff]
    %v450 = vld [vmem:[#allocation2 + $0xd4] sm:$0xf]
    %v451 = vld [vmem:[#allocation2 + $0xe4] sm:$0xff]
    %v452 = vld [vmem:[#allocation2 + $0xec] sm:$0xf]
    %v453 = vld [vmem:[#allocation2 + $0xfc] sm:$0xff]
    %v454 = vld [vmem:[#allocation2 + $0x104] sm:$0xf]
    %v455 = vld [vmem:[#allocation2 + $0x114] sm:$0xff]
    %v456 = vld [vmem:[#allocation2 + $0x11c] sm:$0xf]
    %v457 = vld [vmem:[#allocation2 + $0x12c] sm:$0xff]
    %v458 = vld [vmem:[#allocation2 + $0x134] sm:$0xf]
    %v459 = vld [vmem:[#allocation2 + $0x144] sm:$0xff]
    %v460 = vld [vmem:[#allocation2 + $0x14c] sm:$0xf]
    %v461 = vld [vmem:[#allocation2 + $0x15c] sm:$0xff]
    %v462 = vld [vmem:[#allocation2 + $0x164] sm:$0xf]
    %v463 = vld [vmem:[#allocation2 + $0x174] sm:$0xff]
    %v464 = vld [vmem:[#allocation2 + $0x17c] sm:$0xf]
    %s465 = scalar_lea.vmem %s3, 1
    %v466 = vld [vmem:[%s465] ss:$8 sm:$0x7]
    %v468 = vlaneseq
    %v469 = vshrl.u32 %v468, 7
    %v470 = vsub.s32 0, %v469
    %v471 = vrot.slane %v466, %v470
    %v472 = vlaneseq
    %v473 = vshrl.u32 %v472, 7
    %v474 = vsub.s32 1, %v473
    %v475 = vrot.slane %v466, %v474
    %v476 = vlaneseq
    %v477 = vshrl.u32 %v476, 7
    %v478 = vsub.s32 2, %v477
    %v479 = vrot.slane %v466, %v478
    %v515 = vunpack.c.l.b16 %v433
    %v516 = vunpack.c.h.b16 %v433
    %v517 = vunpack.c.l.b16 %v434
    %v518 = vunpack.c.l.b16 %v435
    %v519 = vunpack.c.h.b16 %v435
    %v520 = vunpack.c.l.b16 %v436
    %v521 = vunpack.c.l.b16 %v437
    %v522 = vunpack.c.h.b16 %v437
    %v523 = vunpack.c.l.b16 %v438
    %v524 = vunpack.c.l.b16 %v439
    %v525 = vunpack.c.h.b16 %v439
    %v526 = vunpack.c.l.b16 %v440
    %v527 = vunpack.c.l.b16 %v441
    %v528 = vunpack.c.h.b16 %v441
    %v529 = vunpack.c.l.b16 %v442
    %v530 = vunpack.c.l.b16 %v443
    %v531 = vunpack.c.h.b16 %v443
    %v532 = vunpack.c.l.b16 %v444
    %v533 = vunpack.c.l.b16 %v445
    %v534 = vunpack.c.h.b16 %v445
    %v535 = vunpack.c.l.b16 %v446
    %v536 = vunpack.c.l.b16 %v447
    %v537 = vunpack.c.h.b16 %v447
    %v538 = vunpack.c.l.b16 %v448
    %v539 = vunpack.c.l.b16 %v449
    %v540 = vunpack.c.h.b16 %v449
    %v541 = vunpack.c.l.b16 %v450
    %v542 = vunpack.c.l.b16 %v451
    %v543 = vunpack.c.h.b16 %v451
    %v544 = vunpack.c.l.b16 %v452
    %v545 = vunpack.c.l.b16 %v453
    %v546 = vunpack.c.h.b16 %v453
    %v547 = vunpack.c.l.b16 %v454
    %v548 = vunpack.c.l.b16 %v455
    %v549 = vunpack.c.h.b16 %v455
    %v550 = vunpack.c.l.b16 %v456
    %v551 = vunpack.c.l.b16 %v457
    %v552 = vunpack.c.h.b16 %v457
    %v553 = vunpack.c.l.b16 %v458
    %v554 = vunpack.c.l.b16 %v459
    %v555 = vunpack.c.h.b16 %v459
    %v556 = vunpack.c.l.b16 %v460
    %v557 = vunpack.c.l.b16 %v461
    %v558 = vunpack.c.h.b16 %v461
    %v559 = vunpack.c.l.b16 %v462
    %v560 = vunpack.c.l.b16 %v463
    %v561 = vunpack.c.h.b16 %v463
    %v562 = vunpack.c.l.b16 %v464
    %v563 = vpack.c.b16 %v518, %v515
    %v564 = vpack.c.b16 %v519, %v516
    %v565 = vpack.c.b16 %v520, %v517
    %v566 = vpack.c.b16 %v524, %v521
    %v567 = vpack.c.b16 %v525, %v522
    %v568 = vpack.c.b16 %v526, %v523
    %v569 = vpack.c.b16 %v530, %v527
    %v570 = vpack.c.b16 %v531, %v528
    %v571 = vpack.c.b16 %v532, %v529
    %v572 = vpack.c.b16 %v536, %v533
    %v573 = vpack.c.b16 %v537, %v534
    %v574 = vpack.c.b16 %v538, %v535
    %v575 = vpack.c.b16 %v542, %v539
    %v576 = vpack.c.b16 %v543, %v540
    %v577 = vpack.c.b16 %v544, %v541
    %v578 = vpack.c.b16 %v548, %v545
    %v579 = vpack.c.b16 %v549, %v546
    %v580 = vpack.c.b16 %v550, %v547
    %v581 = vpack.c.b16 %v554, %v551
    %v582 = vpack.c.b16 %v555, %v552
    %v583 = vpack.c.b16 %v556, %v553
    %v584 = vpack.c.b16 %v560, %v557
    %v585 = vpack.c.b16 %v561, %v558
    %v586 = vpack.c.b16 %v562, %v559
    %611 = vmatprep.subr.bf16.mxu0 %v585
    %612 = vmatpush1.bf16.msra.mxu0 %v584
    %613 = vmatprep.subr.bf16.mxu0 %v582
    %614 = vmatpush1.bf16.msra.mxu0 %v581
    %615 = vmatprep.subr.bf16.mxu0 %v579
    %616 = vmatpush1.bf16.msra.mxu0 %v578
    %617 = vmatprep.subr.bf16.mxu0 %v576
    %618 = vmatpush1.bf16.msra.mxu0 %v575
    %619 = vmatprep.subr.bf16.mxu0 %v573
    %620 = vmatpush1.bf16.msra.mxu0 %v572
    %621 = vmatprep.subr.bf16.mxu0 %v570
    %622 = vmatpush1.bf16.msra.mxu0 %v569
    %623 = vmatprep.subr.bf16.mxu0 %v567
    %624 = vmatpush1.bf16.msra.mxu0 %v566
    %625 = vmatprep.subr.bf16.mxu0 %v564
    %626 = vmatpush1.bf16.msra.mxu0 %v563
    %627 = vmatprep.subr.bf16.mxu0 0
    %628 = vmatpush2.bf16.msra.mxu0 0
    %629 = vmatprep.subr.bf16.mxu0 0
    %630 = vmatpush2.bf16.msra.mxu0 0
    %631 = vmatprep.subr.bf16.mxu0 0
    %632 = vmatpush2.bf16.msra.mxu0 0
    %633 = vmatprep.subr.bf16.mxu0 0
    %634 = vmatpush2.bf16.msra.mxu0 0
    %635 = vmatprep.subr.bf16.mxu0 0
    %636 = vmatpush2.bf16.msra.mxu0 0
    %637 = vmatprep.subr.bf16.mxu0 0
    %638 = vmatpush2.bf16.msra.mxu0 0
    %639 = vmatprep.subr.bf16.mxu0 0
    %640 = vmatpush2.bf16.msra.mxu0 0
    %641 = vmatprep.subr.bf16.mxu0 0
    %642 = vmatpush2.bf16.msra.mxu0 0
    %643 = vmatprep.mubr.bf16.mxu0 0
    %644 = vmatmul.mubr.bf16.gmra.mxu0 %v432
    %v645 = vpop.f32.mrf.mxu0
    %v646 = vadd.f32 %v471, %v645
    %v647 = vpop.f32.mrf.mxu0
    %v648 = vadd.f32 %v475, %v647
    %v649 = vpop.f32.mrf.mxu0
    %v650 = vpop.f32.mrf.mxu0
    %651 = vdwg.mxu0
    %652 = vmatprep.subr.bf16.mxu0 0
    %653 = vmatpush1.bf16.msra.mxu0 %v586
    %654 = vmatprep.subr.bf16.mxu0 0
    %655 = vmatpush1.bf16.msra.mxu0 %v583
    %656 = vmatprep.subr.bf16.mxu0 0
    %657 = vmatpush1.bf16.msra.mxu0 %v580
    %658 = vmatprep.subr.bf16.mxu0 0
    %659 = vmatpush1.bf16.msra.mxu0 %v577
    %660 = vmatprep.subr.bf16.mxu0 0
    %661 = vmatpush1.bf16.msra.mxu0 %v574
    %662 = vmatprep.subr.bf16.mxu0 0
    %663 = vmatpush1.bf16.msra.mxu0 %v571
    %664 = vmatprep.subr.bf16.mxu0 0
    %665 = vmatpush1.bf16.msra.mxu0 %v568
    %666 = vmatprep.subr.bf16.mxu0 0
    %667 = vmatpush1.bf16.msra.mxu0 %v565
    %668 = vmatprep.subr.bf16.mxu0 0
    %669 = vmatpush2.bf16.msra.mxu0 0
    %670 = vmatprep.subr.bf16.mxu0 0
    %671 = vmatpush2.bf16.msra.mxu0 0
    %672 = vmatprep.subr.bf16.mxu0 0
    %673 = vmatpush2.bf16.msra.mxu0 0
    %674 = vmatprep.subr.bf16.mxu0 0
    %675 = vmatpush2.bf16.msra.mxu0 0
    %676 = vmatprep.subr.bf16.mxu0 0
    %677 = vmatpush2.bf16.msra.mxu0 0
    %678 = vmatprep.subr.bf16.mxu0 0
    %679 = vmatpush2.bf16.msra.mxu0 0
    %680 = vmatprep.subr.bf16.mxu0 0
    %681 = vmatpush2.bf16.msra.mxu0 0
    %682 = vmatprep.subr.bf16.mxu0 0
    %683 = vmatpush2.bf16.msra.mxu0 0
    %684 = vmatprep.mubr.bf16.mxu0 0
    %685 = vmatmul.mubr.bf16.gmra.mxu0 %v432
    %v686 = vpop.f32.mrf.mxu0
    %v687 = vadd.f32 %v479, %v686
    %v688 = vpop.f32.mrf.mxu0
    %v689 = vpop.f32.mrf.mxu0
    %v690 = vpop.f32.mrf.mxu0
    %691 = vdwg.mxu0
    %v692 = vadd.f32 %v386, %v646
    %v693 = vxor.u32 %v692, 2147483648
    %v694 = vmul.f32 %v693, 1.442695
    %v695 = vpow.pop %v694
    %v696 = vadd.f32 %v695, 1.0
    %v697 = vrcp.pop %v696
    %v698 = vmul.f32 1.0, %v697
    %v699 = vadd.f32 %v388, %v648
    %v700 = vxor.u32 %v699, 2147483648
    %v701 = vmul.f32 %v700, 1.442695
    %v702 = vpow.pop %v701
    %v703 = vadd.f32 %v702, 1.0
    %v704 = vrcp.pop %v703
    %v705 = vmul.f32 1.0, %v704
    %v706 = vmul.f32 %v698, %v687
    %v707 = vadd.f32 %v427, %v706
    %v708 = vtanh.pop %v707
    %v709 = vsub.f32 1.0, %v705
    %v710 = vmul.f32 %v709, %v708
    %v711 = vmul.f32 %v705, %v172
    %v712 = vadd.f32 %v710, %v711
    %713 = vst [vmem:[%s7] sm:$0xff] %v712
    %s714 = scalar_lea.vmem %s1, 8
    %v715 = vld [vmem:[%s714] sm:$0xff]
    %v716 = vpack.c.bf16 %v712, %v712
    %s717 = scalar_lea.vmem [#allocation2], 384
    %v718 = vld [vmem:[%s717] sm:$0xff]
    %v719 = vld [vmem:[%s717 + $0x8] sm:$0xf]
    %v720 = vld [vmem:[%s717 + $0x18] sm:$0xff]
    %v721 = vld [vmem:[%s717 + $0x20] sm:$0xf]
    %v722 = vld [vmem:[%s717 + $0x30] sm:$0xff]
    %v723 = vld [vmem:[%s717 + $0x38] sm:$0xf]
    %v724 = vld [vmem:[%s717 + $0x48] sm:$0xff]
    %v725 = vld [vmem:[%s717 + $0x50] sm:$0xf]
    %v726 = vld [vmem:[%s717 + $0x60] sm:$0xff]
    %v727 = vld [vmem:[%s717 + $0x68] sm:$0xf]
    %v728 = vld [vmem:[%s717 + $0x78] sm:$0xff]
    %v729 = vld [vmem:[%s717 + $0x80] sm:$0xf]
    %v730 = vld [vmem:[%s717 + $0x90] sm:$0xff]
    %v731 = vld [vmem:[%s717 + $0x98] sm:$0xf]
    %v732 = vld [vmem:[%s717 + $0xa8] sm:$0xff]
    %v733 = vld [vmem:[%s717 + $0xb0] sm:$0xf]
    %v734 = vld [vmem:[%s717 + $0xc0] sm:$0xff]
    %v735 = vld [vmem:[%s717 + $0xc8] sm:$0xf]
    %v736 = vld [vmem:[%s717 + $0xd8] sm:$0xff]
    %v737 = vld [vmem:[%s717 + $0xe0] sm:$0xf]
    %v738 = vld [vmem:[%s717 + $0xf0] sm:$0xff]
    %v739 = vld [vmem:[%s717 + $0xf8] sm:$0xf]
    %v740 = vld [vmem:[%s717 + $0x108] sm:$0xff]
    %v741 = vld [vmem:[%s717 + $0x110] sm:$0xf]
    %v742 = vld [vmem:[%s717 + $0x120] sm:$0xff]
    %v743 = vld [vmem:[%s717 + $0x128] sm:$0xf]
    %v744 = vld [vmem:[%s717 + $0x138] sm:$0xff]
    %v745 = vld [vmem:[%s717 + $0x140] sm:$0xf]
    %v746 = vld [vmem:[%s717 + $0x150] sm:$0xff]
    %v747 = vld [vmem:[%s717 + $0x158] sm:$0xf]
    %v748 = vld [vmem:[%s717 + $0x168] sm:$0xff]
    %v749 = vld [vmem:[%s717 + $0x170] sm:$0xf]
    %s750 = scalar_lea.vmem %s3, 2
    %v751 = vld [vmem:[%s750] ss:$8 sm:$0x7]
    %v753 = vlaneseq
    %v754 = vshrl.u32 %v753, 7
    %v755 = vsub.s32 0, %v754
    %v756 = vrot.slane %v751, %v755
    %v757 = vlaneseq
    %v758 = vshrl.u32 %v757, 7
    %v759 = vsub.s32 1, %v758
    %v760 = vrot.slane %v751, %v759
    %v761 = vlaneseq
    %v762 = vshrl.u32 %v761, 7
    %v763 = vsub.s32 2, %v762
    %v764 = vrot.slane %v751, %v763
    %v800 = vunpack.c.l.b16 %v718
    %v801 = vunpack.c.h.b16 %v718
    %v802 = vunpack.c.l.b16 %v719
    %v803 = vunpack.c.l.b16 %v720
    %v804 = vunpack.c.h.b16 %v720
    %v805 = vunpack.c.l.b16 %v721
    %v806 = vunpack.c.l.b16 %v722
    %v807 = vunpack.c.h.b16 %v722
    %v808 = vunpack.c.l.b16 %v723
    %v809 = vunpack.c.l.b16 %v724
    %v810 = vunpack.c.h.b16 %v724
    %v811 = vunpack.c.l.b16 %v725
    %v812 = vunpack.c.l.b16 %v726
    %v813 = vunpack.c.h.b16 %v726
    %v814 = vunpack.c.l.b16 %v727
    %v815 = vunpack.c.l.b16 %v728
    %v816 = vunpack.c.h.b16 %v728
    %v817 = vunpack.c.l.b16 %v729
    %v818 = vunpack.c.l.b16 %v730
    %v819 = vunpack.c.h.b16 %v730
    %v820 = vunpack.c.l.b16 %v731
    %v821 = vunpack.c.l.b16 %v732
    %v822 = vunpack.c.h.b16 %v732
    %v823 = vunpack.c.l.b16 %v733
    %v824 = vunpack.c.l.b16 %v734
    %v825 = vunpack.c.h.b16 %v734
    %v826 = vunpack.c.l.b16 %v735
    %v827 = vunpack.c.l.b16 %v736
    %v828 = vunpack.c.h.b16 %v736
    %v829 = vunpack.c.l.b16 %v737
    %v830 = vunpack.c.l.b16 %v738
    %v831 = vunpack.c.h.b16 %v738
    %v832 = vunpack.c.l.b16 %v739
    %v833 = vunpack.c.l.b16 %v740
    %v834 = vunpack.c.h.b16 %v740
    %v835 = vunpack.c.l.b16 %v741
    %v836 = vunpack.c.l.b16 %v742
    %v837 = vunpack.c.h.b16 %v742
    %v838 = vunpack.c.l.b16 %v743
    %v839 = vunpack.c.l.b16 %v744
    %v840 = vunpack.c.h.b16 %v744
    %v841 = vunpack.c.l.b16 %v745
    %v842 = vunpack.c.l.b16 %v746
    %v843 = vunpack.c.h.b16 %v746
    %v844 = vunpack.c.l.b16 %v747
    %v845 = vunpack.c.l.b16 %v748
    %v846 = vunpack.c.h.b16 %v748
    %v847 = vunpack.c.l.b16 %v749
    %v848 = vpack.c.b16 %v803, %v800
    %v849 = vpack.c.b16 %v804, %v801
    %v850 = vpack.c.b16 %v805, %v802
    %v851 = vpack.c.b16 %v809, %v806
    %v852 = vpack.c.b16 %v810, %v807
    %v853 = vpack.c.b16 %v811, %v808
    %v854 = vpack.c.b16 %v815, %v812
    %v855 = vpack.c.b16 %v816, %v813
    %v856 = vpack.c.b16 %v817, %v814
    %v857 = vpack.c.b16 %v821, %v818
    %v858 = vpack.c.b16 %v822, %v819
    %v859 = vpack.c.b16 %v823, %v820
    %v860 = vpack.c.b16 %v827, %v824
    %v861 = vpack.c.b16 %v828, %v825
    %v862 = vpack.c.b16 %v829, %v826
    %v863 = vpack.c.b16 %v833, %v830
    %v864 = vpack.c.b16 %v834, %v831
    %v865 = vpack.c.b16 %v835, %v832
    %v866 = vpack.c.b16 %v839, %v836
    %v867 = vpack.c.b16 %v840, %v837
    %v868 = vpack.c.b16 %v841, %v838
    %v869 = vpack.c.b16 %v845, %v842
    %v870 = vpack.c.b16 %v846, %v843
    %v871 = vpack.c.b16 %v847, %v844
    %896 = vmatprep.subr.bf16.mxu0 %v870
    %897 = vmatpush1.bf16.msra.mxu0 %v869
    %898 = vmatprep.subr.bf16.mxu0 %v867
    %899 = vmatpush1.bf16.msra.mxu0 %v866
    %900 = vmatprep.subr.bf16.mxu0 %v864
    %901 = vmatpush1.bf16.msra.mxu0 %v863
    %902 = vmatprep.subr.bf16.mxu0 %v861
    %903 = vmatpush1.bf16.msra.mxu0 %v860
    %904 = vmatprep.subr.bf16.mxu0 %v858
    %905 = vmatpush1.bf16.msra.mxu0 %v857
    %906 = vmatprep.subr.bf16.mxu0 %v855
    %907 = vmatpush1.bf16.msra.mxu0 %v854
    %908 = vmatprep.subr.bf16.mxu0 %v852
    %909 = vmatpush1.bf16.msra.mxu0 %v851
    %910 = vmatprep.subr.bf16.mxu0 %v849
    %911 = vmatpush1.bf16.msra.mxu0 %v848
    %912 = vmatprep.subr.bf16.mxu0 0
    %913 = vmatpush2.bf16.msra.mxu0 0
    %914 = vmatprep.subr.bf16.mxu0 0
    %915 = vmatpush2.bf16.msra.mxu0 0
    %916 = vmatprep.subr.bf16.mxu0 0
    %917 = vmatpush2.bf16.msra.mxu0 0
    %918 = vmatprep.subr.bf16.mxu0 0
    %919 = vmatpush2.bf16.msra.mxu0 0
    %920 = vmatprep.subr.bf16.mxu0 0
    %921 = vmatpush2.bf16.msra.mxu0 0
    %922 = vmatprep.subr.bf16.mxu0 0
    %923 = vmatpush2.bf16.msra.mxu0 0
    %924 = vmatprep.subr.bf16.mxu0 0
    %925 = vmatpush2.bf16.msra.mxu0 0
    %926 = vmatprep.subr.bf16.mxu0 0
    %927 = vmatpush2.bf16.msra.mxu0 0
    %928 = vmatprep.mubr.bf16.mxu0 0
    %929 = vmatmul.mubr.bf16.gmra.mxu0 %v716
    %v930 = vpop.f32.mrf.mxu0
    %v931 = vadd.f32 %v756, %v930
    %v932 = vpop.f32.mrf.mxu0
    %v933 = vadd.f32 %v760, %v932
    %v934 = vpop.f32.mrf.mxu0
    %v935 = vpop.f32.mrf.mxu0
    %936 = vdwg.mxu0
    %937 = vmatprep.subr.bf16.mxu0 0
    %938 = vmatpush1.bf16.msra.mxu0 %v871
    %939 = vmatprep.subr.bf16.mxu0 0
    %940 = vmatpush1.bf16.msra.mxu0 %v868
    %941 = vmatprep.subr.bf16.mxu0 0
    %942 = vmatpush1.bf16.msra.mxu0 %v865
    %943 = vmatprep.subr.bf16.mxu0 0
    %944 = vmatpush1.bf16.msra.mxu0 %v862
    %945 = vmatprep.subr.bf16.mxu0 0
    %946 = vmatpush1.bf16.msra.mxu0 %v859
    %947 = vmatprep.subr.bf16.mxu0 0
    %948 = vmatpush1.bf16.msra.mxu0 %v856
    %949 = vmatprep.subr.bf16.mxu0 0
    %950 = vmatpush1.bf16.msra.mxu0 %v853
    %951 = vmatprep.subr.bf16.mxu0 0
    %952 = vmatpush1.bf16.msra.mxu0 %v850
    %953 = vmatprep.subr.bf16.mxu0 0
    %954 = vmatpush2.bf16.msra.mxu0 0
    %955 = vmatprep.subr.bf16.mxu0 0
    %956 = vmatpush2.bf16.msra.mxu0 0
    %957 = vmatprep.subr.bf16.mxu0 0
    %958 = vmatpush2.bf16.msra.mxu0 0
    %959 = vmatprep.subr.bf16.mxu0 0
    %960 = vmatpush2.bf16.msra.mxu0 0
    %961 = vmatprep.subr.bf16.mxu0 0
    %962 = vmatpush2.bf16.msra.mxu0 0
    %963 = vmatprep.subr.bf16.mxu0 0
    %964 = vmatpush2.bf16.msra.mxu0 0
    %965 = vmatprep.subr.bf16.mxu0 0
    %966 = vmatpush2.bf16.msra.mxu0 0
    %967 = vmatprep.subr.bf16.mxu0 0
    %968 = vmatpush2.bf16.msra.mxu0 0
    %969 = vmatprep.mubr.bf16.mxu0 0
    %970 = vmatmul.mubr.bf16.gmra.mxu0 %v716
    %v971 = vpop.f32.mrf.mxu0
    %v972 = vadd.f32 %v764, %v971
    %v973 = vpop.f32.mrf.mxu0
    %v974 = vpop.f32.mrf.mxu0
    %v975 = vpop.f32.mrf.mxu0
    %976 = vdwg.mxu0
    %v977 = vpack.c.bf16 %v715, %v715
    %v978 = vld [vmem:[%s717 + $0xc] sm:$0xff]
    %v979 = vld [vmem:[%s717 + $0x14] sm:$0xf]
    %v980 = vld [vmem:[%s717 + $0x24] sm:$0xff]
    %v981 = vld [vmem:[%s717 + $0x2c] sm:$0xf]
    %v982 = vld [vmem:[%s717 + $0x3c] sm:$0xff]
    %v983 = vld [vmem:[%s717 + $0x44] sm:$0xf]
    %v984 = vld [vmem:[%s717 + $0x54] sm:$0xff]
    %v985 = vld [vmem:[%s717 + $0x5c] sm:$0xf]
    %v986 = vld [vmem:[%s717 + $0x6c] sm:$0xff]
    %v987 = vld [vmem:[%s717 + $0x74] sm:$0xf]
    %v988 = vld [vmem:[%s717 + $0x84] sm:$0xff]
    %v989 = vld [vmem:[%s717 + $0x8c] sm:$0xf]
    %v990 = vld [vmem:[%s717 + $0x9c] sm:$0xff]
    %v991 = vld [vmem:[%s717 + $0xa4] sm:$0xf]
    %v992 = vld [vmem:[%s717 + $0xb4] sm:$0xff]
    %v993 = vld [vmem:[%s717 + $0xbc] sm:$0xf]
    %v994 = vld [vmem:[%s717 + $0xcc] sm:$0xff]
    %v995 = vld [vmem:[%s717 + $0xd4] sm:$0xf]
    %v996 = vld [vmem:[%s717 + $0xe4] sm:$0xff]
    %v997 = vld [vmem:[%s717 + $0xec] sm:$0xf]
    %v998 = vld [vmem:[%s717 + $0xfc] sm:$0xff]
    %v999 = vld [vmem:[%s717 + $0x104] sm:$0xf]
    %v1000 = vld [vmem:[%s717 + $0x114] sm:$0xff]
    %v1001 = vld [vmem:[%s717 + $0x11c] sm:$0xf]
    %v1002 = vld [vmem:[%s717 + $0x12c] sm:$0xff]
    %v1003 = vld [vmem:[%s717 + $0x134] sm:$0xf]
    %v1004 = vld [vmem:[%s717 + $0x144] sm:$0xff]
    %v1005 = vld [vmem:[%s717 + $0x14c] sm:$0xf]
    %v1006 = vld [vmem:[%s717 + $0x15c] sm:$0xff]
    %v1007 = vld [vmem:[%s717 + $0x164] sm:$0xf]
    %v1008 = vld [vmem:[%s717 + $0x174] sm:$0xff]
    %v1009 = vld [vmem:[%s717 + $0x17c] sm:$0xf]
    %s1010 = scalar_lea.vmem %s3, 3
    %v1011 = vld [vmem:[%s1010] ss:$8 sm:$0x7]
    %v1013 = vlaneseq
    %v1014 = vshrl.u32 %v1013, 7
    %v1015 = vsub.s32 0, %v1014
    %v1016 = vrot.slane %v1011, %v1015
    %v1017 = vlaneseq
    %v1018 = vshrl.u32 %v1017, 7
    %v1019 = vsub.s32 1, %v1018
    %v1020 = vrot.slane %v1011, %v1019
    %v1021 = vlaneseq
    %v1022 = vshrl.u32 %v1021, 7
    %v1023 = vsub.s32 2, %v1022
    %v1024 = vrot.slane %v1011, %v1023
    %v1060 = vunpack.c.l.b16 %v978
    %v1061 = vunpack.c.h.b16 %v978
    %v1062 = vunpack.c.l.b16 %v979
    %v1063 = vunpack.c.l.b16 %v980
    %v1064 = vunpack.c.h.b16 %v980
    %v1065 = vunpack.c.l.b16 %v981
    %v1066 = vunpack.c.l.b16 %v982
    %v1067 = vunpack.c.h.b16 %v982
    %v1068 = vunpack.c.l.b16 %v983
    %v1069 = vunpack.c.l.b16 %v984
    %v1070 = vunpack.c.h.b16 %v984
    %v1071 = vunpack.c.l.b16 %v985
    %v1072 = vunpack.c.l.b16 %v986
    %v1073 = vunpack.c.h.b16 %v986
    %v1074 = vunpack.c.l.b16 %v987
    %v1075 = vunpack.c.l.b16 %v988
    %v1076 = vunpack.c.h.b16 %v988
    %v1077 = vunpack.c.l.b16 %v989
    %v1078 = vunpack.c.l.b16 %v990
    %v1079 = vunpack.c.h.b16 %v990
    %v1080 = vunpack.c.l.b16 %v991
    %v1081 = vunpack.c.l.b16 %v992
    %v1082 = vunpack.c.h.b16 %v992
    %v1083 = vunpack.c.l.b16 %v993
    %v1084 = vunpack.c.l.b16 %v994
    %v1085 = vunpack.c.h.b16 %v994
    %v1086 = vunpack.c.l.b16 %v995
    %v1087 = vunpack.c.l.b16 %v996
    %v1088 = vunpack.c.h.b16 %v996
    %v1089 = vunpack.c.l.b16 %v997
    %v1090 = vunpack.c.l.b16 %v998
    %v1091 = vunpack.c.h.b16 %v998
    %v1092 = vunpack.c.l.b16 %v999
    %v1093 = vunpack.c.l.b16 %v1000
    %v1094 = vunpack.c.h.b16 %v1000
    %v1095 = vunpack.c.l.b16 %v1001
    %v1096 = vunpack.c.l.b16 %v1002
    %v1097 = vunpack.c.h.b16 %v1002
    %v1098 = vunpack.c.l.b16 %v1003
    %v1099 = vunpack.c.l.b16 %v1004
    %v1100 = vunpack.c.h.b16 %v1004
    %v1101 = vunpack.c.l.b16 %v1005
    %v1102 = vunpack.c.l.b16 %v1006
    %v1103 = vunpack.c.h.b16 %v1006
    %v1104 = vunpack.c.l.b16 %v1007
    %v1105 = vunpack.c.l.b16 %v1008
    %v1106 = vunpack.c.h.b16 %v1008
    %v1107 = vunpack.c.l.b16 %v1009
    %v1108 = vpack.c.b16 %v1063, %v1060
    %v1109 = vpack.c.b16 %v1064, %v1061
    %v1110 = vpack.c.b16 %v1065, %v1062
    %v1111 = vpack.c.b16 %v1069, %v1066
    %v1112 = vpack.c.b16 %v1070, %v1067
    %v1113 = vpack.c.b16 %v1071, %v1068
    %v1114 = vpack.c.b16 %v1075, %v1072
    %v1115 = vpack.c.b16 %v1076, %v1073
    %v1116 = vpack.c.b16 %v1077, %v1074
    %v1117 = vpack.c.b16 %v1081, %v1078
    %v1118 = vpack.c.b16 %v1082, %v1079
    %v1119 = vpack.c.b16 %v1083, %v1080
    %v1120 = vpack.c.b16 %v1087, %v1084
    %v1121 = vpack.c.b16 %v1088, %v1085
    %v1122 = vpack.c.b16 %v1089, %v1086
    %v1123 = vpack.c.b16 %v1093, %v1090
    %v1124 = vpack.c.b16 %v1094, %v1091
    %v1125 = vpack.c.b16 %v1095, %v1092
    %v1126 = vpack.c.b16 %v1099, %v1096
    %v1127 = vpack.c.b16 %v1100, %v1097
    %v1128 = vpack.c.b16 %v1101, %v1098
    %v1129 = vpack.c.b16 %v1105, %v1102
    %v1130 = vpack.c.b16 %v1106, %v1103
    %v1131 = vpack.c.b16 %v1107, %v1104
    %1156 = vmatprep.subr.bf16.mxu0 %v1130
    %1157 = vmatpush1.bf16.msra.mxu0 %v1129
    %1158 = vmatprep.subr.bf16.mxu0 %v1127
    %1159 = vmatpush1.bf16.msra.mxu0 %v1126
    %1160 = vmatprep.subr.bf16.mxu0 %v1124
    %1161 = vmatpush1.bf16.msra.mxu0 %v1123
    %1162 = vmatprep.subr.bf16.mxu0 %v1121
    %1163 = vmatpush1.bf16.msra.mxu0 %v1120
    %1164 = vmatprep.subr.bf16.mxu0 %v1118
    %1165 = vmatpush1.bf16.msra.mxu0 %v1117
    %1166 = vmatprep.subr.bf16.mxu0 %v1115
    %1167 = vmatpush1.bf16.msra.mxu0 %v1114
    %1168 = vmatprep.subr.bf16.mxu0 %v1112
    %1169 = vmatpush1.bf16.msra.mxu0 %v1111
    %1170 = vmatprep.subr.bf16.mxu0 %v1109
    %1171 = vmatpush1.bf16.msra.mxu0 %v1108
    %1172 = vmatprep.subr.bf16.mxu0 0
    %1173 = vmatpush2.bf16.msra.mxu0 0
    %1174 = vmatprep.subr.bf16.mxu0 0
    %1175 = vmatpush2.bf16.msra.mxu0 0
    %1176 = vmatprep.subr.bf16.mxu0 0
    %1177 = vmatpush2.bf16.msra.mxu0 0
    %1178 = vmatprep.subr.bf16.mxu0 0
    %1179 = vmatpush2.bf16.msra.mxu0 0
    %1180 = vmatprep.subr.bf16.mxu0 0
    %1181 = vmatpush2.bf16.msra.mxu0 0
    %1182 = vmatprep.subr.bf16.mxu0 0
    %1183 = vmatpush2.bf16.msra.mxu0 0
    %1184 = vmatprep.subr.bf16.mxu0 0
    %1185 = vmatpush2.bf16.msra.mxu0 0
    %1186 = vmatprep.subr.bf16.mxu0 0
    %1187 = vmatpush2.bf16.msra.mxu0 0
    %1188 = vmatprep.mubr.bf16.mxu0 0
    %1189 = vmatmul.mubr.bf16.gmra.mxu0 %v977
    %v1190 = vpop.f32.mrf.mxu0
    %v1191 = vadd.f32 %v1016, %v1190
    %v1192 = vpop.f32.mrf.mxu0
    %v1193 = vadd.f32 %v1020, %v1192
    %v1194 = vpop.f32.mrf.mxu0
    %v1195 = vpop.f32.mrf.mxu0
    %1196 = vdwg.mxu0
    %1197 = vmatprep.subr.bf16.mxu0 0
    %1198 = vmatpush1.bf16.msra.mxu0 %v1131
    %1199 = vmatprep.subr.bf16.mxu0 0
    %1200 = vmatpush1.bf16.msra.mxu0 %v1128
    %1201 = vmatprep.subr.bf16.mxu0 0
    %1202 = vmatpush1.bf16.msra.mxu0 %v1125
    %1203 = vmatprep.subr.bf16.mxu0 0
    %1204 = vmatpush1.bf16.msra.mxu0 %v1122
    %1205 = vmatprep.subr.bf16.mxu0 0
    %1206 = vmatpush1.bf16.msra.mxu0 %v1119
    %1207 = vmatprep.subr.bf16.mxu0 0
    %1208 = vmatpush1.bf16.msra.mxu0 %v1116
    %1209 = vmatprep.subr.bf16.mxu0 0
    %1210 = vmatpush1.bf16.msra.mxu0 %v1113
    %1211 = vmatprep.subr.bf16.mxu0 0
    %1212 = vmatpush1.bf16.msra.mxu0 %v1110
    %1213 = vmatprep.subr.bf16.mxu0 0
    %1214 = vmatpush2.bf16.msra.mxu0 0
    %1215 = vmatprep.subr.bf16.mxu0 0
    %1216 = vmatpush2.bf16.msra.mxu0 0
    %1217 = vmatprep.subr.bf16.mxu0 0
    %1218 = vmatpush2.bf16.msra.mxu0 0
    %1219 = vmatprep.subr.bf16.mxu0 0
    %1220 = vmatpush2.bf16.msra.mxu0 0
    %1221 = vmatprep.subr.bf16.mxu0 0
    %1222 = vmatpush2.bf16.msra.mxu0 0
    %1223 = vmatprep.subr.bf16.mxu0 0
    %1224 = vmatpush2.bf16.msra.mxu0 0
    %1225 = vmatprep.subr.bf16.mxu0 0
    %1226 = vmatpush2.bf16.msra.mxu0 0
    %1227 = vmatprep.subr.bf16.mxu0 0
    %1228 = vmatpush2.bf16.msra.mxu0 0
    %1229 = vmatprep.mubr.bf16.mxu0 0
    %1230 = vmatmul.mubr.bf16.gmra.mxu0 %v977
    %v1231 = vpop.f32.mrf.mxu0
    %v1232 = vadd.f32 %v1024, %v1231
    %v1233 = vpop.f32.mrf.mxu0
    %v1234 = vpop.f32.mrf.mxu0
    %v1235 = vpop.f32.mrf.mxu0
    %1236 = vdwg.mxu0
    %v1237 = vadd.f32 %v931, %v1191
    %v1238 = vxor.u32 %v1237, 2147483648
    %v1239 = vmul.f32 %v1238, 1.442695
    %v1240 = vpow.pop %v1239
    %v1241 = vadd.f32 %v1240, 1.0
    %v1242 = vrcp.pop %v1241
    %v1243 = vmul.f32 1.0, %v1242
    %v1244 = vadd.f32 %v933, %v1193
    %v1245 = vxor.u32 %v1244, 2147483648
    %v1246 = vmul.f32 %v1245, 1.442695
    %v1247 = vpow.pop %v1246
    %v1248 = vadd.f32 %v1247, 1.0
    %v1249 = vrcp.pop %v1248
    %v1250 = vmul.f32 1.0, %v1249
    %v1251 = vmul.f32 %v1243, %v1232
    %v1252 = vadd.f32 %v972, %v1251
    %v1253 = vtanh.pop %v1252
    %v1254 = vsub.f32 1.0, %v1250
    %v1255 = vmul.f32 %v1254, %v1253
    %v1256 = vmul.f32 %v1250, %v715
    %v1257 = vadd.f32 %v1255, %v1256
    %s1258 = scalar_lea.vmem %s7, 8
    %1259 = vst [vmem:[%s1258] sm:$0xff] %v1257
    %s1260 = scalar_lea.vmem %s1, 16
    %v1261 = vld [vmem:[%s1260] sm:$0xff]
    %v1262 = vpack.c.bf16 %v1257, %v1257
    %s1263 = scalar_lea.vmem [#allocation2], 768
    %v1264 = vld [vmem:[%s1263] sm:$0xff]
    %v1265 = vld [vmem:[%s1263 + $0x8] sm:$0xf]
    %v1266 = vld [vmem:[%s1263 + $0x18] sm:$0xff]
    %v1267 = vld [vmem:[%s1263 + $0x20] sm:$0xf]
    %v1268 = vld [vmem:[%s1263 + $0x30] sm:$0xff]
    %v1269 = vld [vmem:[%s1263 + $0x38] sm:$0xf]
    %v1270 = vld [vmem:[%s1263 + $0x48] sm:$0xff]
    %v1271 = vld [vmem:[%s1263 + $0x50] sm:$0xf]
    %v1272 = vld [vmem:[%s1263 + $0x60] sm:$0xff]
    %v1273 = vld [vmem:[%s1263 + $0x68] sm:$0xf]
    %v1274 = vld [vmem:[%s1263 + $0x78] sm:$0xff]
    %v1275 = vld [vmem:[%s1263 + $0x80] sm:$0xf]
    %v1276 = vld [vmem:[%s1263 + $0x90] sm:$0xff]
    %v1277 = vld [vmem:[%s1263 + $0x98] sm:$0xf]
    %v1278 = vld [vmem:[%s1263 + $0xa8] sm:$0xff]
    %v1279 = vld [vmem:[%s1263 + $0xb0] sm:$0xf]
    %v1280 = vld [vmem:[%s1263 + $0xc0] sm:$0xff]
    %v1281 = vld [vmem:[%s1263 + $0xc8] sm:$0xf]
    %v1282 = vld [vmem:[%s1263 + $0xd8] sm:$0xff]
    %v1283 = vld [vmem:[%s1263 + $0xe0] sm:$0xf]
    %v1284 = vld [vmem:[%s1263 + $0xf0] sm:$0xff]
    %v1285 = vld [vmem:[%s1263 + $0xf8] sm:$0xf]
    %v1286 = vld [vmem:[%s1263 + $0x108] sm:$0xff]
    %v1287 = vld [vmem:[%s1263 + $0x110] sm:$0xf]
    %v1288 = vld [vmem:[%s1263 + $0x120] sm:$0xff]
    %v1289 = vld [vmem:[%s1263 + $0x128] sm:$0xf]
    %v1290 = vld [vmem:[%s1263 + $0x138] sm:$0xff]
    %v1291 = vld [vmem:[%s1263 + $0x140] sm:$0xf]
    %v1292 = vld [vmem:[%s1263 + $0x150] sm:$0xff]
    %v1293 = vld [vmem:[%s1263 + $0x158] sm:$0xf]
    %v1294 = vld [vmem:[%s1263 + $0x168] sm:$0xff]
    %v1295 = vld [vmem:[%s1263 + $0x170] sm:$0xf]
    %s1296 = scalar_lea.vmem %s3, 4
    %v1297 = vld [vmem:[%s1296] ss:$8 sm:$0x7]
    %v1299 = vlaneseq
    %v1300 = vshrl.u32 %v1299, 7
    %v1301 = vsub.s32 0, %v1300
    %v1302 = vrot.slane %v1297, %v1301
    %v1303 = vlaneseq
    %v1304 = vshrl.u32 %v1303, 7
    %v1305 = vsub.s32 1, %v1304
    %v1306 = vrot.slane %v1297, %v1305
    %v1307 = vlaneseq
    %v1308 = vshrl.u32 %v1307, 7
    %v1309 = vsub.s32 2, %v1308
    %v1310 = vrot.slane %v1297, %v1309
    %v1346 = vunpack.c.l.b16 %v1264
    %v1347 = vunpack.c.h.b16 %v1264
    %v1348 = vunpack.c.l.b16 %v1265
    %v1349 = vunpack.c.l.b16 %v1266
    %v1350 = vunpack.c.h.b16 %v1266
    %v1351 = vunpack.c.l.b16 %v1267
    %v1352 = vunpack.c.l.b16 %v1268
    %v1353 = vunpack.c.h.b16 %v1268
    %v1354 = vunpack.c.l.b16 %v1269
    %v1355 = vunpack.c.l.b16 %v1270
    %v1356 = vunpack.c.h.b16 %v1270
    %v1357 = vunpack.c.l.b16 %v1271
    %v1358 = vunpack.c.l.b16 %v1272
    %v1359 = vunpack.c.h.b16 %v1272
    %v1360 = vunpack.c.l.b16 %v1273
    %v1361 = vunpack.c.l.b16 %v1274
    %v1362 = vunpack.c.h.b16 %v1274
    %v1363 = vunpack.c.l.b16 %v1275
    %v1364 = vunpack.c.l.b16 %v1276
    %v1365 = vunpack.c.h.b16 %v1276
    %v1366 = vunpack.c.l.b16 %v1277
    %v1367 = vunpack.c.l.b16 %v1278
    %v1368 = vunpack.c.h.b16 %v1278
    %v1369 = vunpack.c.l.b16 %v1279
    %v1370 = vunpack.c.l.b16 %v1280
    %v1371 = vunpack.c.h.b16 %v1280
    %v1372 = vunpack.c.l.b16 %v1281
    %v1373 = vunpack.c.l.b16 %v1282
    %v1374 = vunpack.c.h.b16 %v1282
    %v1375 = vunpack.c.l.b16 %v1283
    %v1376 = vunpack.c.l.b16 %v1284
    %v1377 = vunpack.c.h.b16 %v1284
    %v1378 = vunpack.c.l.b16 %v1285
    %v1379 = vunpack.c.l.b16 %v1286
    %v1380 = vunpack.c.h.b16 %v1286
    %v1381 = vunpack.c.l.b16 %v1287
    %v1382 = vunpack.c.l.b16 %v1288
    %v1383 = vunpack.c.h.b16 %v1288
    %v1384 = vunpack.c.l.b16 %v1289
    %v1385 = vunpack.c.l.b16 %v1290
    %v1386 = vunpack.c.h.b16 %v1290
    %v1387 = vunpack.c.l.b16 %v1291
    %v1388 = vunpack.c.l.b16 %v1292
    %v1389 = vunpack.c.h.b16 %v1292
    %v1390 = vunpack.c.l.b16 %v1293
    %v1391 = vunpack.c.l.b16 %v1294
    %v1392 = vunpack.c.h.b16 %v1294
    %v1393 = vunpack.c.l.b16 %v1295
    %v1394 = vpack.c.b16 %v1349, %v1346
    %v1395 = vpack.c.b16 %v1350, %v1347
    %v1396 = vpack.c.b16 %v1351, %v1348
    %v1397 = vpack.c.b16 %v1355, %v1352
    %v1398 = vpack.c.b16 %v1356, %v1353
    %v1399 = vpack.c.b16 %v1357, %v1354
    %v1400 = vpack.c.b16 %v1361, %v1358
    %v1401 = vpack.c.b16 %v1362, %v1359
    %v1402 = vpack.c.b16 %v1363, %v1360
    %v1403 = vpack.c.b16 %v1367, %v1364
    %v1404 = vpack.c.b16 %v1368, %v1365
    %v1405 = vpack.c.b16 %v1369, %v1366
    %v1406 = vpack.c.b16 %v1373, %v1370
    %v1407 = vpack.c.b16 %v1374, %v1371
    %v1408 = vpack.c.b16 %v1375, %v1372
    %v1409 = vpack.c.b16 %v1379, %v1376
    %v1410 = vpack.c.b16 %v1380, %v1377
    %v1411 = vpack.c.b16 %v1381, %v1378
    %v1412 = vpack.c.b16 %v1385, %v1382
    %v1413 = vpack.c.b16 %v1386, %v1383
    %v1414 = vpack.c.b16 %v1387, %v1384
    %v1415 = vpack.c.b16 %v1391, %v1388
    %v1416 = vpack.c.b16 %v1392, %v1389
    %v1417 = vpack.c.b16 %v1393, %v1390
    %1442 = vmatprep.subr.bf16.mxu0 %v1416
    %1443 = vmatpush1.bf16.msra.mxu0 %v1415
    %1444 = vmatprep.subr.bf16.mxu0 %v1413
    %1445 = vmatpush1.bf16.msra.mxu0 %v1412
    %1446 = vmatprep.subr.bf16.mxu0 %v1410
    %1447 = vmatpush1.bf16.msra.mxu0 %v1409
    %1448 = vmatprep.subr.bf16.mxu0 %v1407
    %1449 = vmatpush1.bf16.msra.mxu0 %v1406
    %1450 = vmatprep.subr.bf16.mxu0 %v1404
    %1451 = vmatpush1.bf16.msra.mxu0 %v1403
    %1452 = vmatprep.subr.bf16.mxu0 %v1401
    %1453 = vmatpush1.bf16.msra.mxu0 %v1400
    %1454 = vmatprep.subr.bf16.mxu0 %v1398
    %1455 = vmatpush1.bf16.msra.mxu0 %v1397
    %1456 = vmatprep.subr.bf16.mxu0 %v1395
    %1457 = vmatpush1.bf16.msra.mxu0 %v1394
    %1458 = vmatprep.subr.bf16.mxu0 0
    %1459 = vmatpush2.bf16.msra.mxu0 0
    %1460 = vmatprep.subr.bf16.mxu0 0
    %1461 = vmatpush2.bf16.msra.mxu0 0
    %1462 = vmatprep.subr.bf16.mxu0 0
    %1463 = vmatpush2.bf16.msra.mxu0 0
    %1464 = vmatprep.subr.bf16.mxu0 0
    %1465 = vmatpush2.bf16.msra.mxu0 0
    %1466 = vmatprep.subr.bf16.mxu0 0
    %1467 = vmatpush2.bf16.msra.mxu0 0
    %1468 = vmatprep.subr.bf16.mxu0 0
    %1469 = vmatpush2.bf16.msra.mxu0 0
    %1470 = vmatprep.subr.bf16.mxu0 0
    %1471 = vmatpush2.bf16.msra.mxu0 0
    %1472 = vmatprep.subr.bf16.mxu0 0
    %1473 = vmatpush2.bf16.msra.mxu0 0
    %1474 = vmatprep.mubr.bf16.mxu0 0
    %1475 = vmatmul.mubr.bf16.gmra.mxu0 %v1262
    %v1476 = vpop.f32.mrf.mxu0
    %v1477 = vadd.f32 %v1302, %v1476
    %v1478 = vpop.f32.mrf.mxu0
    %v1479 = vadd.f32 %v1306, %v1478
    %v1480 = vpop.f32.mrf.mxu0
    %v1481 = vpop.f32.mrf.mxu0
    %1482 = vdwg.mxu0
    %1483 = vmatprep.subr.bf16.mxu0 0
    %1484 = vmatpush1.bf16.msra.mxu0 %v1417
    %1485 = vmatprep.subr.bf16.mxu0 0
    %1486 = vmatpush1.bf16.msra.mxu0 %v1414
    %1487 = vmatprep.subr.bf16.mxu0 0
    %1488 = vmatpush1.bf16.msra.mxu0 %v1411
    %1489 = vmatprep.subr.bf16.mxu0 0
    %1490 = vmatpush1.bf16.msra.mxu0 %v1408
    %1491 = vmatprep.subr.bf16.mxu0 0
    %1492 = vmatpush1.bf16.msra.mxu0 %v1405
    %1493 = vmatprep.subr.bf16.mxu0 0
    %1494 = vmatpush1.bf16.msra.mxu0 %v1402
    %1495 = vmatprep.subr.bf16.mxu0 0
    %1496 = vmatpush1.bf16.msra.mxu0 %v1399
    %1497 = vmatprep.subr.bf16.mxu0 0
    %1498 = vmatpush1.bf16.msra.mxu0 %v1396
    %1499 = vmatprep.subr.bf16.mxu0 0
    %1500 = vmatpush2.bf16.msra.mxu0 0
    %1501 = vmatprep.subr.bf16.mxu0 0
    %1502 = vmatpush2.bf16.msra.mxu0 0
    %1503 = vmatprep.subr.bf16.mxu0 0
    %1504 = vmatpush2.bf16.msra.mxu0 0
    %1505 = vmatprep.subr.bf16.mxu0 0
    %1506 = vmatpush2.bf16.msra.mxu0 0
    %1507 = vmatprep.subr.bf16.mxu0 0
    %1508 = vmatpush2.bf16.msra.mxu0 0
    %1509 = vmatprep.subr.bf16.mxu0 0
    %1510 = vmatpush2.bf16.msra.mxu0 0
    %1511 = vmatprep.subr.bf16.mxu0 0
    %1512 = vmatpush2.bf16.msra.mxu0 0
    %1513 = vmatprep.subr.bf16.mxu0 0
    %1514 = vmatpush2.bf16.msra.mxu0 0
    %1515 = vmatprep.mubr.bf16.mxu0 0
    %1516 = vmatmul.mubr.bf16.gmra.mxu0 %v1262
    %v1517 = vpop.f32.mrf.mxu0
    %v1518 = vadd.f32 %v1310, %v1517
    %v1519 = vpop.f32.mrf.mxu0
    %v1520 = vpop.f32.mrf.mxu0
    %v1521 = vpop.f32.mrf.mxu0
    %1522 = vdwg.mxu0
    %v1523 = vpack.c.bf16 %v1261, %v1261
    %v1524 = vld [vmem:[%s1263 + $0xc] sm:$0xff]
    %v1525 = vld [vmem:[%s1263 + $0x14] sm:$0xf]
    %v1526 = vld [vmem:[%s1263 + $0x24] sm:$0xff]
    %v1527 = vld [vmem:[%s1263 + $0x2c] sm:$0xf]
    %v1528 = vld [vmem:[%s1263 + $0x3c] sm:$0xff]
    %v1529 = vld [vmem:[%s1263 + $0x44] sm:$0xf]
    %v1530 = vld [vmem:[%s1263 + $0x54] sm:$0xff]
    %v1531 = vld [vmem:[%s1263 + $0x5c] sm:$0xf]
    %v1532 = vld [vmem:[%s1263 + $0x6c] sm:$0xff]
    %v1533 = vld [vmem:[%s1263 + $0x74] sm:$0xf]
    %v1534 = vld [vmem:[%s1263 + $0x84] sm:$0xff]
    %v1535 = vld [vmem:[%s1263 + $0x8c] sm:$0xf]
    %v1536 = vld [vmem:[%s1263 + $0x9c] sm:$0xff]
    %v1537 = vld [vmem:[%s1263 + $0xa4] sm:$0xf]
    %v1538 = vld [vmem:[%s1263 + $0xb4] sm:$0xff]
    %v1539 = vld [vmem:[%s1263 + $0xbc] sm:$0xf]
    %v1540 = vld [vmem:[%s1263 + $0xcc] sm:$0xff]
    %v1541 = vld [vmem:[%s1263 + $0xd4] sm:$0xf]
    %v1542 = vld [vmem:[%s1263 + $0xe4] sm:$0xff]
    %v1543 = vld [vmem:[%s1263 + $0xec] sm:$0xf]
    %v1544 = vld [vmem:[%s1263 + $0xfc] sm:$0xff]
    %v1545 = vld [vmem:[%s1263 + $0x104] sm:$0xf]
    %v1546 = vld [vmem:[%s1263 + $0x114] sm:$0xff]
    %v1547 = vld [vmem:[%s1263 + $0x11c] sm:$0xf]
    %v1548 = vld [vmem:[%s1263 + $0x12c] sm:$0xff]
    %v1549 = vld [vmem:[%s1263 + $0x134] sm:$0xf]
    %v1550 = vld [vmem:[%s1263 + $0x144] sm:$0xff]
    %v1551 = vld [vmem:[%s1263 + $0x14c] sm:$0xf]
    %v1552 = vld [vmem:[%s1263 + $0x15c] sm:$0xff]
    %v1553 = vld [vmem:[%s1263 + $0x164] sm:$0xf]
    %v1554 = vld [vmem:[%s1263 + $0x174] sm:$0xff]
    %v1555 = vld [vmem:[%s1263 + $0x17c] sm:$0xf]
    %s1556 = scalar_lea.vmem %s3, 5
    %v1557 = vld [vmem:[%s1556] ss:$8 sm:$0x7]
    %v1559 = vlaneseq
    %v1560 = vshrl.u32 %v1559, 7
    %v1561 = vsub.s32 0, %v1560
    %v1562 = vrot.slane %v1557, %v1561
    %v1563 = vlaneseq
    %v1564 = vshrl.u32 %v1563, 7
    %v1565 = vsub.s32 1, %v1564
    %v1566 = vrot.slane %v1557, %v1565
    %v1567 = vlaneseq
    %v1568 = vshrl.u32 %v1567, 7
    %v1569 = vsub.s32 2, %v1568
    %v1570 = vrot.slane %v1557, %v1569
    %v1606 = vunpack.c.l.b16 %v1524
    %v1607 = vunpack.c.h.b16 %v1524
    %v1608 = vunpack.c.l.b16 %v1525
    %v1609 = vunpack.c.l.b16 %v1526
    %v1610 = vunpack.c.h.b16 %v1526
    %v1611 = vunpack.c.l.b16 %v1527
    %v1612 = vunpack.c.l.b16 %v1528
    %v1613 = vunpack.c.h.b16 %v1528
    %v1614 = vunpack.c.l.b16 %v1529
    %v1615 = vunpack.c.l.b16 %v1530
    %v1616 = vunpack.c.h.b16 %v1530
    %v1617 = vunpack.c.l.b16 %v1531
    %v1618 = vunpack.c.l.b16 %v1532
    %v1619 = vunpack.c.h.b16 %v1532
    %v1620 = vunpack.c.l.b16 %v1533
    %v1621 = vunpack.c.l.b16 %v1534
    %v1622 = vunpack.c.h.b16 %v1534
    %v1623 = vunpack.c.l.b16 %v1535
    %v1624 = vunpack.c.l.b16 %v1536
    %v1625 = vunpack.c.h.b16 %v1536
    %v1626 = vunpack.c.l.b16 %v1537
    %v1627 = vunpack.c.l.b16 %v1538
    %v1628 = vunpack.c.h.b16 %v1538
    %v1629 = vunpack.c.l.b16 %v1539
    %v1630 = vunpack.c.l.b16 %v1540
    %v1631 = vunpack.c.h.b16 %v1540
    %v1632 = vunpack.c.l.b16 %v1541
    %v1633 = vunpack.c.l.b16 %v1542
    %v1634 = vunpack.c.h.b16 %v1542
    %v1635 = vunpack.c.l.b16 %v1543
    %v1636 = vunpack.c.l.b16 %v1544
    %v1637 = vunpack.c.h.b16 %v1544
    %v1638 = vunpack.c.l.b16 %v1545
    %v1639 = vunpack.c.l.b16 %v1546
    %v1640 = vunpack.c.h.b16 %v1546
    %v1641 = vunpack.c.l.b16 %v1547
    %v1642 = vunpack.c.l.b16 %v1548
    %v1643 = vunpack.c.h.b16 %v1548
    %v1644 = vunpack.c.l.b16 %v1549
    %v1645 = vunpack.c.l.b16 %v1550
    %v1646 = vunpack.c.h.b16 %v1550
    %v1647 = vunpack.c.l.b16 %v1551
    %v1648 = vunpack.c.l.b16 %v1552
    %v1649 = vunpack.c.h.b16 %v1552
    %v1650 = vunpack.c.l.b16 %v1553
    %v1651 = vunpack.c.l.b16 %v1554
    %v1652 = vunpack.c.h.b16 %v1554
    %v1653 = vunpack.c.l.b16 %v1555
    %v1654 = vpack.c.b16 %v1609, %v1606
    %v1655 = vpack.c.b16 %v1610, %v1607
    %v1656 = vpack.c.b16 %v1611, %v1608
    %v1657 = vpack.c.b16 %v1615, %v1612
    %v1658 = vpack.c.b16 %v1616, %v1613
    %v1659 = vpack.c.b16 %v1617, %v1614
    %v1660 = vpack.c.b16 %v1621, %v1618
    %v1661 = vpack.c.b16 %v1622, %v1619
    %v1662 = vpack.c.b16 %v1623, %v1620
    %v1663 = vpack.c.b16 %v1627, %v1624
    %v1664 = vpack.c.b16 %v1628, %v1625
    %v1665 = vpack.c.b16 %v1629, %v1626
    %v1666 = vpack.c.b16 %v1633, %v1630
    %v1667 = vpack.c.b16 %v1634, %v1631
    %v1668 = vpack.c.b16 %v1635, %v1632
    %v1669 = vpack.c.b16 %v1639, %v1636
    %v1670 = vpack.c.b16 %v1640, %v1637
    %v1671 = vpack.c.b16 %v1641, %v1638
    %v1672 = vpack.c.b16 %v1645, %v1642
    %v1673 = vpack.c.b16 %v1646, %v1643
    %v1674 = vpack.c.b16 %v1647, %v1644
    %v1675 = vpack.c.b16 %v1651, %v1648
    %v1676 = vpack.c.b16 %v1652, %v1649
    %v1677 = vpack.c.b16 %v1653, %v1650
    %1702 = vmatprep.subr.bf16.mxu0 %v1676
    %1703 = vmatpush1.bf16.msra.mxu0 %v1675
    %1704 = vmatprep.subr.bf16.mxu0 %v1673
    %1705 = vmatpush1.bf16.msra.mxu0 %v1672
    %1706 = vmatprep.subr.bf16.mxu0 %v1670
    %1707 = vmatpush1.bf16.msra.mxu0 %v1669
    %1708 = vmatprep.subr.bf16.mxu0 %v1667
    %1709 = vmatpush1.bf16.msra.mxu0 %v1666
    %1710 = vmatprep.subr.bf16.mxu0 %v1664
    %1711 = vmatpush1.bf16.msra.mxu0 %v1663
    %1712 = vmatprep.subr.bf16.mxu0 %v1661
    %1713 = vmatpush1.bf16.msra.mxu0 %v1660
    %1714 = vmatprep.subr.bf16.mxu0 %v1658
    %1715 = vmatpush1.bf16.msra.mxu0 %v1657
    %1716 = vmatprep.subr.bf16.mxu0 %v1655
    %1717 = vmatpush1.bf16.msra.mxu0 %v1654
    %1718 = vmatprep.subr.bf16.mxu0 0
    %1719 = vmatpush2.bf16.msra.mxu0 0
    %1720 = vmatprep.subr.bf16.mxu0 0
    %1721 = vmatpush2.bf16.msra.mxu0 0
    %1722 = vmatprep.subr.bf16.mxu0 0
    %1723 = vmatpush2.bf16.msra.mxu0 0
    %1724 = vmatprep.subr.bf16.mxu0 0
    %1725 = vmatpush2.bf16.msra.mxu0 0
    %1726 = vmatprep.subr.bf16.mxu0 0
    %1727 = vmatpush2.bf16.msra.mxu0 0
    %1728 = vmatprep.subr.bf16.mxu0 0
    %1729 = vmatpush2.bf16.msra.mxu0 0
    %1730 = vmatprep.subr.bf16.mxu0 0
    %1731 = vmatpush2.bf16.msra.mxu0 0
    %1732 = vmatprep.subr.bf16.mxu0 0
    %1733 = vmatpush2.bf16.msra.mxu0 0
    %1734 = vmatprep.mubr.bf16.mxu0 0
    %1735 = vmatmul.mubr.bf16.gmra.mxu0 %v1523
    %v1736 = vpop.f32.mrf.mxu0
    %v1737 = vadd.f32 %v1562, %v1736
    %v1738 = vpop.f32.mrf.mxu0
    %v1739 = vadd.f32 %v1566, %v1738
    %v1740 = vpop.f32.mrf.mxu0
    %v1741 = vpop.f32.mrf.mxu0
    %1742 = vdwg.mxu0
    %1743 = vmatprep.subr.bf16.mxu0 0
    %1744 = vmatpush1.bf16.msra.mxu0 %v1677
    %1745 = vmatprep.subr.bf16.mxu0 0
    %1746 = vmatpush1.bf16.msra.mxu0 %v1674
    %1747 = vmatprep.subr.bf16.mxu0 0
    %1748 = vmatpush1.bf16.msra.mxu0 %v1671
    %1749 = vmatprep.subr.bf16.mxu0 0
    %1750 = vmatpush1.bf16.msra.mxu0 %v1668
    %1751 = vmatprep.subr.bf16.mxu0 0
    %1752 = vmatpush1.bf16.msra.mxu0 %v1665
    %1753 = vmatprep.subr.bf16.mxu0 0
    %1754 = vmatpush1.bf16.msra.mxu0 %v1662
    %1755 = vmatprep.subr.bf16.mxu0 0
    %1756 = vmatpush1.bf16.msra.mxu0 %v1659
    %1757 = vmatprep.subr.bf16.mxu0 0
    %1758 = vmatpush1.bf16.msra.mxu0 %v1656
    %1759 = vmatprep.subr.bf16.mxu0 0
    %1760 = vmatpush2.bf16.msra.mxu0 0
    %1761 = vmatprep.subr.bf16.mxu0 0
    %1762 = vmatpush2.bf16.msra.mxu0 0
    %1763 = vmatprep.subr.bf16.mxu0 0
    %1764 = vmatpush2.bf16.msra.mxu0 0
    %1765 = vmatprep.subr.bf16.mxu0 0
    %1766 = vmatpush2.bf16.msra.mxu0 0
    %1767 = vmatprep.subr.bf16.mxu0 0
    %1768 = vmatpush2.bf16.msra.mxu0 0
    %1769 = vmatprep.subr.bf16.mxu0 0
    %1770 = vmatpush2.bf16.msra.mxu0 0
    %1771 = vmatprep.subr.bf16.mxu0 0
    %1772 = vmatpush2.bf16.msra.mxu0 0
    %1773 = vmatprep.subr.bf16.mxu0 0
    %1774 = vmatpush2.bf16.msra.mxu0 0
    %1775 = vmatprep.mubr.bf16.mxu0 0
    %1776 = vmatmul.mubr.bf16.gmra.mxu0 %v1523
    %v1777 = vpop.f32.mrf.mxu0
    %v1778 = vadd.f32 %v1570, %v1777
    %v1779 = vpop.f32.mrf.mxu0
    %v1780 = vpop.f32.mrf.mxu0
    %v1781 = vpop.f32.mrf.mxu0
    %1782 = vdwg.mxu0
    %v1783 = vadd.f32 %v1477, %v1737
    %v1784 = vxor.u32 %v1783, 2147483648
    %v1785 = vmul.f32 %v1784, 1.442695
    %v1786 = vpow.pop %v1785
    %v1787 = vadd.f32 %v1786, 1.0
    %v1788 = vrcp.pop %v1787
    %v1789 = vmul.f32 1.0, %v1788
    %v1790 = vadd.f32 %v1479, %v1739
    %v1791 = vxor.u32 %v1790, 2147483648
    %v1792 = vmul.f32 %v1791, 1.442695
    %v1793 = vpow.pop %v1792
    %v1794 = vadd.f32 %v1793, 1.0
    %v1795 = vrcp.pop %v1794
    %v1796 = vmul.f32 1.0, %v1795
    %v1797 = vmul.f32 %v1789, %v1778
    %v1798 = vadd.f32 %v1518, %v1797
    %v1799 = vtanh.pop %v1798
    %v1800 = vsub.f32 1.0, %v1796
    %v1801 = vmul.f32 %v1800, %v1799
    %v1802 = vmul.f32 %v1796, %v1261
    %v1803 = vadd.f32 %v1801, %v1802
    %s1804 = scalar_lea.vmem %s7, 16
    %1805 = vst [vmem:[%s1804] sm:$0xff] %v1803
    %v1806 = vpack.c.bf16 %v1803, %v1803
    %v1807 = vld [vmem:[#allocation5] sm:$0xf]
    %v1808 = vld [vmem:[#allocation5 + $0x4] sm:$0xf]
    %v1809 = vld [vmem:[#allocation5 + $0x8] sm:$0xf]
    %v1810 = vld [vmem:[#allocation5 + $0xc] sm:$0xf]
    %v1811 = vld [vmem:[#allocation5 + $0x10] sm:$0xf]
    %v1812 = vld [vmem:[#allocation5 + $0x14] sm:$0xf]
    %v1813 = vld [vmem:[#allocation5 + $0x18] sm:$0xf]
    %v1814 = vld [vmem:[#allocation5 + $0x1c] sm:$0xf]
    %v1815 = vld [vmem:[#allocation5 + $0x20] sm:$0xf]
    %v1816 = vld [vmem:[#allocation5 + $0x24] sm:$0xf]
    %v1817 = vld [vmem:[#allocation5 + $0x28] sm:$0xf]
    %v1818 = vld [vmem:[#allocation5 + $0x2c] sm:$0xf]
    %v1819 = vld [vmem:[#allocation5 + $0x30] sm:$0xf]
    %v1820 = vld [vmem:[#allocation5 + $0x34] sm:$0xf]
    %v1821 = vld [vmem:[#allocation5 + $0x38] sm:$0xf]
    %v1822 = vld [vmem:[#allocation5 + $0x3c] sm:$0xf]
    %v1823 = vld [vmem:[%s6] sm:$0x1]
    %v1825 = vlaneseq
    %v1826 = vshrl.u32 %v1825, 7
    %v1827 = vsub.s32 0, %v1826
    %v1828 = vrot.slane %v1823, %v1827
    %v1846 = vunpack.c.l.b16 %v1807
    %v1847 = vunpack.c.l.b16 %v1808
    %v1848 = vunpack.c.l.b16 %v1809
    %v1849 = vunpack.c.l.b16 %v1810
    %v1850 = vunpack.c.l.b16 %v1811
    %v1851 = vunpack.c.l.b16 %v1812
    %v1852 = vunpack.c.l.b16 %v1813
    %v1853 = vunpack.c.l.b16 %v1814
    %v1854 = vunpack.c.l.b16 %v1815
    %v1855 = vunpack.c.l.b16 %v1816
    %v1856 = vunpack.c.l.b16 %v1817
    %v1857 = vunpack.c.l.b16 %v1818
    %v1858 = vunpack.c.l.b16 %v1819
    %v1859 = vunpack.c.l.b16 %v1820
    %v1860 = vunpack.c.l.b16 %v1821
    %v1861 = vunpack.c.l.b16 %v1822
    %v1862 = vpack.c.b16 %v1847, %v1846
    %v1863 = vpack.c.b16 %v1849, %v1848
    %v1864 = vpack.c.b16 %v1851, %v1850
    %v1865 = vpack.c.b16 %v1853, %v1852
    %v1866 = vpack.c.b16 %v1855, %v1854
    %v1867 = vpack.c.b16 %v1857, %v1856
    %v1868 = vpack.c.b16 %v1859, %v1858
    %v1869 = vpack.c.b16 %v1861, %v1860
    %1878 = vmatprep.subr.bf16.mxu0 0
    %1879 = vmatpush1.bf16.msra.mxu0 %v1869
    %1880 = vmatprep.subr.bf16.mxu0 0
    %1881 = vmatpush1.bf16.msra.mxu0 %v1868
    %1882 = vmatprep.subr.bf16.mxu0 0
    %1883 = vmatpush1.bf16.msra.mxu0 %v1867
    %1884 = vmatprep.subr.bf16.mxu0 0
    %1885 = vmatpush1.bf16.msra.mxu0 %v1866
    %1886 = vmatprep.subr.bf16.mxu0 0
    %1887 = vmatpush1.bf16.msra.mxu0 %v1865
    %1888 = vmatprep.subr.bf16.mxu0 0
    %1889 = vmatpush1.bf16.msra.mxu0 %v1864
    %1890 = vmatprep.subr.bf16.mxu0 0
    %1891 = vmatpush1.bf16.msra.mxu0 %v1863
    %1892 = vmatprep.subr.bf16.mxu0 0
    %1893 = vmatpush1.bf16.msra.mxu0 %v1862
    %1894 = vmatprep.subr.bf16.mxu0 0
    %1895 = vmatpush2.bf16.msra.mxu0 0
    %1896 = vmatprep.subr.bf16.mxu0 0
    %1897 = vmatpush2.bf16.msra.mxu0 0
    %1898 = vmatprep.subr.bf16.mxu0 0
    %1899 = vmatpush2.bf16.msra.mxu0 0
    %1900 = vmatprep.subr.bf16.mxu0 0
    %1901 = vmatpush2.bf16.msra.mxu0 0
    %1902 = vmatprep.subr.bf16.mxu0 0
    %1903 = vmatpush2.bf16.msra.mxu0 0
    %1904 = vmatprep.subr.bf16.mxu0 0
    %1905 = vmatpush2.bf16.msra.mxu0 0
    %1906 = vmatprep.subr.bf16.mxu0 0
    %1907 = vmatpush2.bf16.msra.mxu0 0
    %1908 = vmatprep.subr.bf16.mxu0 0
    %1909 = vmatpush2.bf16.msra.mxu0 0
    %1910 = vmatprep.mubr.bf16.mxu0 0
    %1911 = vmatmul.mubr.bf16.gmra.mxu0 %v1806
    %v1912 = vpop.f32.mrf.mxu0
    %v1913 = vadd.f32 %v1828, %v1912
    %v1914 = vpop.f32.mrf.mxu0
    %v1915 = vpop.f32.mrf.mxu0
    %v1916 = vpop.f32.mrf.mxu0
    %1917 = vdwg.mxu0
    %1918 = vst [vmem:[#allocation7] sm:$0xff] %v1913
    // Predicated region
    $region38: #{decoder_forward.1} parent=1 // pred_check
      _
    $region39: #{decoder_forward.1} parent=1 // pred_check_branch
      %1920 = sbr.rel (0) target = $region41
    $region40: #{decoder_forward.1} parent=1 // pred_region
      _
    $region41: #{decoder_forward.1} parent=1 // pred_fallthru
      _
    // Predicated region
    $region42: #{decoder_forward.1} parent=1 // pred_check
      _
    $region43: #{decoder_forward.1} parent=1 // pred_check_branch
      %1922 = sbr.rel (0) target = $region45
    $region44: #{decoder_forward.1} parent=1 // pred_region
      %s1924 = ssub.s32 128, 128
      %1925 = vsyncadd [#allocation4], %s1924
      %s1927 = sshll.u32 [#allocation7], 4
      %s1928 = int_to_ptr.vmem [resolvable:$true] %s1927
      %1930 = dma.vmem_to_hbm [thread:$0]  %s1928, 128, %s8, [#allocation4]
    $region45: #{decoder_forward.1} parent=1 // pred_fallthru
      _
    // Predicated region
    $region46: #{decoder_forward.1} parent=1 // pred_check
      _
    $region47: #{decoder_forward.1} parent=1 // pred_check_branch
      %1932 = sbr.rel (0) target = $region49
    $region48: #{decoder_forward.1} parent=1 // pred_region
      _
    $region49: #{decoder_forward.1} parent=1 // pred_fallthru
      _
    // Predicated region
    $region50: #{decoder_forward.1} parent=1 // pred_check
      _
    $region51: #{decoder_forward.1} parent=1 // pred_check_branch
      %1934 = sbr.rel (0) target = $region53
    $region52: #{decoder_forward.1} parent=1 // pred_region
      %1935 = dma.done [#allocation4], 128
    $region53: #{decoder_forward.1} parent=1 // pred_fallthru
      _
    %1936 = vsyncpa [#allocation3], 1
    %1937 = vsyncpa [#allocation6], 1
    %1938 = vsyncpa [#allocation4], 1

</llo_original>
